<compile_context>
chip_gen: v6e
topology: v6e:2x2x1
jax: 0.10.0
libtpu: 0.0.40
codegen_flags: <defaults>
</compile_context>

<pallas_src>
import functools

import jax
import jax.numpy as jnp
import numpy as np
from jax import lax
from jax.experimental import pallas as pl
from jax.experimental.pallas import tpu as pltpu


def _round_up(x, m):
    return ((x + m - 1) // m) * m


# ---------------------------------------------------------------------------
# Fused Pallas kernel: conv stem + ReLU + GAP + avg consensus + new_fc
# (one grid step for the whole batch)
# ---------------------------------------------------------------------------
def tsn_fused_kernel(p_ref, wc_ref, bc_ref, pool_ref, wf_ref, bf_ref, o_ref):
    """Single grid step = whole batch.

    p_ref:    (B*S*H*W, KP)  bf16  im2col patches, K zero-padded to 128 lanes
    wc_ref:   (KP, CFP)      bf16  conv weight, rows (kh,kw,cin), zero-padded
    bc_ref:   (1, CFP)       f32   conv bias (zero-padded on Cf)
    pool_ref: (B, B*S*H*W)   f32   block-diagonal 1/(S*H*W) pooling matrix
                                   (fused global-avg-pool + avg consensus)
    wf_ref:   (CFP, NCP)     f32   fc weight, zero-padded rows (Cf) & cols (nc)
    bf_ref:   (1, NCP)       f32   fc bias, zero-padded
    o_ref:    (B, NCP)       f32   per-video logits (lane-dense padded slab)
    """
    # Conv stem as one fat MXU matmul (bf16 operands, f32 accumulation).
    act = jnp.dot(p_ref[...], wc_ref[...], preferred_element_type=jnp.float32)
    act = jnp.maximum(act + bc_ref[...], 0.0)                  # bias + ReLU (VPU)
    # GAP over H*W and avg consensus over segments fused into one MXU matmul
    # with a block-diagonal 1/M pooling matrix -> row reduction stays off the
    # XLU and all B feature rows come out at once.
    feat = jnp.dot(pool_ref[...], act, preferred_element_type=jnp.float32)
    # new_fc applied after consensus (mean commutes with the affine fc).
    o_ref[...] = jnp.dot(feat, wf_ref[...],
                         preferred_element_type=jnp.float32) + bf_ref[...]


# ---------------------------------------------------------------------------
# Glue (reshapes / im2col / lane padding) in plain JAX
# ---------------------------------------------------------------------------
def _im2col_3x3(x_nhwc):
    """(N, H, W, Cin) -> (N, H*W, 9*Cin) with SAME padding, order (kh, kw, cin)."""
    n, h, w, cin = x_nhwc.shape
    xp = jnp.pad(x_nhwc, ((0, 0), (1, 1), (1, 1), (0, 0)))
    cols = [xp[:, kh:kh + h, kw:kw + w, :] for kh in range(3) for kw in range(3)]
    patches = jnp.concatenate(cols, axis=-1)                   # (N, H, W, 9*Cin)
    return patches.reshape(n, h * w, 9 * cin)


@functools.partial(jax.jit, static_argnames=("num_segments",))
def tsn_forward(x, w_conv, b_conv, w_fc, b_fc, num_segments):
    """x: (B, num_segments * sample_len, H, W)  NCHW, float32."""
    B = x.shape[0]
    S = num_segments
    sample_len = w_conv.shape[2]
    H, W = x.shape[2], x.shape[3]
    Cf = w_conv.shape[3]
    nc = w_fc.shape[1]
    M = S * H * W                      # rows per video
    BM = B * M                         # total rows
    K = 9 * sample_len

    # Lane-dense padded sizes (exact: padded rows/cols are zero end-to-end).
    KP = _round_up(K, 128)
    CFP = _round_up(Cf, 128)
    NCP = _round_up(nc, 128)

    # input.view((-1, sample_len) + input.size()[2:]) then NCHW -> NHWC, bf16.
    xr = x.reshape(B * S, sample_len, H, W)
    xn = jnp.transpose(xr, (0, 2, 3, 1)).astype(jnp.bfloat16)
    patches = _im2col_3x3(xn).reshape(BM, K)                   # (B*M, K) bf16
    patches_p = jnp.zeros((BM, KP), jnp.bfloat16).at[:, :K].set(patches)

    # Conv weight: HWIO -> (K, Cf), rows ordered (kh, kw, cin); zero-pad both axes.
    wc = w_conv.reshape(K, Cf).astype(jnp.bfloat16)
    wc_p = jnp.zeros((KP, CFP), jnp.bfloat16).at[:K, :Cf].set(wc)
    bc_p = jnp.zeros((1, CFP), jnp.float32).at[:, :Cf].set(b_conv.reshape(1, Cf))

    # Block-diagonal pooling matrix: feat[b] = mean over that video's S*H*W rows.
    row = lax.broadcasted_iota(jnp.int32, (B, BM), 0)
    col = lax.broadcasted_iota(jnp.int32, (B, BM), 1)
    pool = jnp.where(col // M == row, 1.0 / M, 0.0).astype(jnp.float32)

    # FC weight/bias zero-padded on both axes (Cf rows, class cols).
    wf_p = jnp.zeros((CFP, NCP), jnp.float32).at[:Cf, :nc].set(w_fc)
    bf_p = jnp.zeros((1, NCP), jnp.float32).at[:, :nc].set(b_fc.reshape(1, nc))

    out_p = pl.pallas_call(
        tsn_fused_kernel,
        out_shape=jax.ShapeDtypeStruct((B, NCP), jnp.float32),
        grid=(1,),
        in_specs=[
            pl.BlockSpec((BM, KP), lambda i: (0, 0)),
            pl.BlockSpec((KP, CFP), lambda i: (0, 0)),
            pl.BlockSpec((1, CFP), lambda i: (0, 0)),
            pl.BlockSpec((B, BM), lambda i: (0, 0)),
            pl.BlockSpec((CFP, NCP), lambda i: (0, 0)),
            pl.BlockSpec((1, NCP), lambda i: (0, 0)),
        ],
        out_specs=pl.BlockSpec((B, NCP), lambda i: (0, 0)),
        compiler_params=pltpu.CompilerParams(
            dimension_semantics=("arbitrary",)),
    )(patches_p, wc_p, bc_p, pool, wf_p, bf_p)

    # consensus keepdim -> (B, 1, num_class); .squeeze(-1) only acts if nc == 1.
    out = out_p[:, :nc].reshape(B, 1, nc)
    if out.shape[-1] == 1:
        out = jnp.squeeze(out, axis=-1)
    return out


# ---------------------------------------------------------------------------
# Pure-JAX f32 reference (same math as the PyTorch module) for correctness
# ---------------------------------------------------------------------------
def tsn_reference(x, w_conv, b_conv, w_fc, b_fc, num_segments):
    B = x.shape[0]
    sample_len = w_conv.shape[2]
    H, W = x.shape[2], x.shape[3]
    xr = x.reshape(B * num_segments, sample_len, H, W)
    xn = jnp.transpose(xr, (0, 2, 3, 1))
    conv = lax.conv_general_dilated(
        xn, w_conv, window_strides=(1, 1), padding="SAME",
        dimension_numbers=("NHWC", "HWIO", "NHWC"))
    conv = jnp.maximum(conv + b_conv, 0.0)
    feats = jnp.mean(conv, axis=(1, 2))                        # GAP -> (N, Cf)
    logits = feats @ w_fc + b_fc                               # new_fc
    logits = logits.reshape(B, num_segments, -1)
    return jnp.mean(logits, axis=1, keepdims=True)             # avg consensus


# ---------------------------------------------------------------------------
if __name__ == "__main__":
    # Small shapes consistent with the module (RGB modality -> new_length = 1).
    B, S = 2, 4                      # batch, num_segments
    sample_len = 3 * 1               # 3 * new_length
    H = W = 16
    feature_dim = 64                 # synthetic stand-in for resnet101's 2048
    num_class = 16

    key = jax.random.PRNGKey(0)
    k_x, k_conv, k_fc = jax.random.split(key, 3)

    x = jax.random.normal(k_x, (B, S * sample_len, H, W), jnp.float32)
    # Synthetic base-model stem weights (deterministic).
    w_conv = 0.1 * jax.random.normal(k_conv, (3, 3, sample_len, feature_dim),
                                     jnp.float32)              # HWIO
    b_conv = jnp.zeros((feature_dim,), jnp.float32)
    # new_fc init per _prepare_tsn: normal(0, 0.001) weight, zero bias.
    w_fc = 0.001 * jax.random.normal(k_fc, (feature_dim, num_class), jnp.float32)
    b_fc = jnp.zeros((num_class,), jnp.float32)

    out = tsn_forward(x, w_conv, b_conv, w_fc, b_fc, num_segments=S)
    out = jax.block_until_ready(out)

    ref = tsn_reference(x, w_conv, b_conv, w_fc, b_fc, num_segments=S)
    assert out.shape == (B, 1, num_class), out.shape
    # bf16 conv operands + reassociated reductions -> loosened tolerance.
    np.testing.assert_allclose(np.asarray(out), np.asarray(ref),
                               rtol=2e-2, atol=2e-4)
    print("KERNEL_OK")
</pallas_src>

<mosaic_0001>
module attributes {stable_mosaic.version = 11 : i64} {
  func.func @tsn_fused_kernel(%arg0: i32, %arg1: memref<2048x128xbf16, #tpu.memory_space<vmem>>, %arg2: memref<128x128xbf16, #tpu.memory_space<vmem>>, %arg3: memref<1x128xf32, #tpu.memory_space<vmem>>, %arg4: memref<2x2048xf32, #tpu.memory_space<vmem>>, %arg5: memref<128x128xf32, #tpu.memory_space<vmem>>, %arg6: memref<1x128xf32, #tpu.memory_space<vmem>>, %arg7: memref<2x128xf32, #tpu.memory_space<vmem>>) attributes {dimension_semantics = [#tpu.dimension_semantics<arbitrary>], iteration_bounds = array<i64: 1>, scalar_prefetch = 0 : i64, scratch_operands = 0 : i64, tpu.core_type = #tpu.core_type<tc>, window_params = [{pipeline_mode = #tpu.pipeline_mode<synchronous>, transform_indices = @transform_0, window_bounds = array<i64: 2048, 128>}, {pipeline_mode = #tpu.pipeline_mode<synchronous>, transform_indices = @transform_1, window_bounds = array<i64: 128, 128>}, {pipeline_mode = #tpu.pipeline_mode<synchronous>, transform_indices = @transform_2, window_bounds = array<i64: 1, 128>}, {pipeline_mode = #tpu.pipeline_mode<synchronous>, transform_indices = @transform_3, window_bounds = array<i64: 2, 2048>}, {pipeline_mode = #tpu.pipeline_mode<synchronous>, transform_indices = @transform_4, window_bounds = array<i64: 128, 128>}, {pipeline_mode = #tpu.pipeline_mode<synchronous>, transform_indices = @transform_5, window_bounds = array<i64: 1, 128>}, {pipeline_mode = #tpu.pipeline_mode<synchronous>, transform_indices = @transform_6, window_bounds = array<i64: 2, 128>}]} {
    %c0 = arith.constant 0 : index
    %c0_0 = arith.constant 0 : index
    %0 = vector.load %arg1[%c0, %c0_0] : memref<2048x128xbf16, #tpu.memory_space<vmem>>, vector<2048x128xbf16>
    %c0_1 = arith.constant 0 : index
    %c0_2 = arith.constant 0 : index
    %1 = vector.load %arg2[%c0_1, %c0_2] : memref<128x128xbf16, #tpu.memory_space<vmem>>, vector<128x128xbf16>
    %cst = arith.constant dense<0.000000e+00> : vector<2048x128xf32>
    %2 = tpu.matmul %0, %1, %cst {dimension_numbers = #tpu.dot_dimension_numbers<[1], [0], [0], [1], [0, 0, 1, 1], [], []>} : vector<2048x128xbf16>, vector<128x128xbf16>, vector<2048x128xf32> -> vector<2048x128xf32>
    %c0_3 = arith.constant 0 : index
    %c0_4 = arith.constant 0 : index
    %3 = vector.load %arg3[%c0_3, %c0_4] : memref<1x128xf32, #tpu.memory_space<vmem>>, vector<1x128xf32>
    %4 = vector.broadcast %3 : vector<1x128xf32> to vector<2048x128xf32>
    %5 = arith.addf %2, %4 : vector<2048x128xf32>
    %cst_5 = arith.constant 0.000000e+00 : f32
    %6 = vector.broadcast %cst_5 : f32 to vector<2048x128xf32>
    %7 = arith.maximumf %5, %6 : vector<2048x128xf32>
    %c0_6 = arith.constant 0 : index
    %c0_7 = arith.constant 0 : index
    %8 = vector.load %arg4[%c0_6, %c0_7] : memref<2x2048xf32, #tpu.memory_space<vmem>>, vector<2x2048xf32>
    %cst_8 = arith.constant dense<0.000000e+00> : vector<2x128xf32>
    %9 = tpu.matmul %8, %7, %cst_8 {dimension_numbers = #tpu.dot_dimension_numbers<[1], [0], [0], [1], [0, 0, 1, 1], [], []>} : vector<2x2048xf32>, vector<2048x128xf32>, vector<2x128xf32> -> vector<2x128xf32>
    %c0_9 = arith.constant 0 : index
    %c0_10 = arith.constant 0 : index
    %10 = vector.load %arg5[%c0_9, %c0_10] : memref<128x128xf32, #tpu.memory_space<vmem>>, vector<128x128xf32>
    %cst_11 = arith.constant dense<0.000000e+00> : vector<2x128xf32>
    %11 = tpu.matmul %9, %10, %cst_11 {dimension_numbers = #tpu.dot_dimension_numbers<[1], [0], [0], [1], [0, 0, 1, 1], [], []>} : vector<2x128xf32>, vector<128x128xf32>, vector<2x128xf32> -> vector<2x128xf32>
    %c0_12 = arith.constant 0 : index
    %c0_13 = arith.constant 0 : index
    %12 = vector.load %arg6[%c0_12, %c0_13] : memref<1x128xf32, #tpu.memory_space<vmem>>, vector<1x128xf32>
    %13 = vector.broadcast %12 : vector<1x128xf32> to vector<2x128xf32>
    %14 = arith.addf %11, %13 : vector<2x128xf32>
    %c0_14 = arith.constant 0 : index
    %c0_15 = arith.constant 0 : index
    %15 = vector.load %arg7[%c0_14, %c0_15] : memref<2x128xf32, #tpu.memory_space<vmem>>, vector<2x128xf32>
    tpu.vector_store %arg7[%c0_14, %c0_15], %14 {strides = array<i32>} : memref<2x128xf32, #tpu.memory_space<vmem>>, vector<2x128xf32>,
    return
  }
  func.func @transform_0(%arg0: i32) -> (i32, i32) {
    %c0_i32 = arith.constant 0 : i32
    %c0_i32_0 = arith.constant 0 : i32
    %c0_i32_1 = arith.constant 0 : i32
    return %c0_i32, %c0_i32_0 : i32, i32
  }
  func.func @transform_1(%arg0: i32) -> (i32, i32) {
    %c0_i32 = arith.constant 0 : i32
    %c0_i32_0 = arith.constant 0 : i32
    %c0_i32_1 = arith.constant 0 : i32
    return %c0_i32, %c0_i32_0 : i32, i32
  }
  func.func @transform_2(%arg0: i32) -> (i32, i32) {
    %c0_i32 = arith.constant 0 : i32
    %c0_i32_0 = arith.constant 0 : i32
    %c0_i32_1 = arith.constant 0 : i32
    return %c0_i32, %c0_i32_0 : i32, i32
  }
  func.func @transform_3(%arg0: i32) -> (i32, i32) {
    %c0_i32 = arith.constant 0 : i32
    %c0_i32_0 = arith.constant 0 : i32
    %c0_i32_1 = arith.constant 0 : i32
    return %c0_i32, %c0_i32_0 : i32, i32
  }
  func.func @transform_4(%arg0: i32) -> (i32, i32) {
    %c0_i32 = arith.constant 0 : i32
    %c0_i32_0 = arith.constant 0 : i32
    %c0_i32_1 = arith.constant 0 : i32
    return %c0_i32, %c0_i32_0 : i32, i32
  }
  func.func @transform_5(%arg0: i32) -> (i32, i32) {
    %c0_i32 = arith.constant 0 : i32
    %c0_i32_0 = arith.constant 0 : i32
    %c0_i32_1 = arith.constant 0 : i32
    return %c0_i32, %c0_i32_0 : i32, i32
  }
  func.func @transform_6(%arg0: i32) -> (i32, i32) {
    %c0_i32 = arith.constant 0 : i32
    %c0_i32_0 = arith.constant 0 : i32
    %c0_i32_1 = arith.constant 0 : i32
    return %c0_i32, %c0_i32_0 : i32, i32
  }
}

</mosaic_0001>

<llo_original>
// kernel: tsn_forward.1
$region0: #{tsn_forward.1}
  #allocation0 [shape = 'u32[]', space=smem, size = 0x4, offset = 0x4, fixed_abs, tag = 'smem constant byte address 0x4 - core index']
  #allocation1 [shape = 'u32[144,128]{1,0:T(1,128)}', space=vmem, size = 0x12000, scoped, tag = 'internal scratch']
  %s0 = inlined_call_operand.vmem [shape: bf16[2048,128], index: 0, kind: input, shape index: {}]
  %s1 = inlined_call_operand.vmem [shape: bf16[128,128], index: 1, kind: input, shape index: {}]
  %s2 = inlined_call_operand.vmem [shape: f32[1,128], index: 2, kind: input, shape index: {}]
  %s3 = inlined_call_operand.vmem [shape: f32[2,2048], index: 3, kind: input, shape index: {}]
  %s4 = inlined_call_operand.vmem [shape: f32[128,128], index: 4, kind: input, shape index: {}]
  %s5 = inlined_call_operand.vmem [shape: f32[1,128], index: 5, kind: input, shape index: {}]
  %s6 = inlined_call_operand.hbm [shape: f32[2,128], index: 6, kind: output, shape index: {}]
  %s7 = sld [smem:[#allocation0]]
  $region34: #{tsn_forward.1} parent=0
    _
  %s9 = ssub.s32 1, %s7
  %s10 = scalar_select 0, %s9, %s7
  $region1: #{tsn_forward.1} parent=0
    #allocation2 [shape = 'u8[1024]{0}', space=vmem, size = 0x400, scoped, tag = 'output window, operand 0, single buffered']
    #allocation3 [shape = 's32[1]{0}', space=sflag, size = 0x4, scoped, tag = 'scoped memory for tsn_forward.1']
    %11 = vsyncpa [#allocation3], 0
    // Predicated region
    $region2: #{tsn_forward.1} parent=1 // pred_check
      _
    $region3: #{tsn_forward.1} parent=1 // pred_check_branch
      %13 = sbr.rel (0) target = $region5
    $region4: #{tsn_forward.1} parent=1 // pred_region
      _
    $region5: #{tsn_forward.1} parent=1 // pred_fallthru
      _
    // Predicated region
    $region6: #{tsn_forward.1} parent=1 // pred_check
      _
    $region7: #{tsn_forward.1} parent=1 // pred_check_branch
      %15 = sbr.rel (0) target = $region9
    $region8: #{tsn_forward.1} parent=1 // pred_region
      _
    $region9: #{tsn_forward.1} parent=1 // pred_fallthru
      _
    // Predicated region
    $region10: #{tsn_forward.1} parent=1 // pred_check
      _
    $region11: #{tsn_forward.1} parent=1 // pred_check_branch
      %17 = sbr.rel (0) target = $region13
    $region12: #{tsn_forward.1} parent=1 // pred_region
      _
    $region13: #{tsn_forward.1} parent=1 // pred_fallthru
      _
    // Predicated region
    $region14: #{tsn_forward.1} parent=1 // pred_check
      _
    $region15: #{tsn_forward.1} parent=1 // pred_check_branch
      %19 = sbr.rel (0) target = $region17
    $region16: #{tsn_forward.1} parent=1 // pred_region
      _
    $region17: #{tsn_forward.1} parent=1 // pred_fallthru
      _
    // Predicated region
    $region18: #{tsn_forward.1} parent=1 // pred_check
      _
    $region19: #{tsn_forward.1} parent=1 // pred_check_branch
      %21 = sbr.rel (0) target = $region21
    $region20: #{tsn_forward.1} parent=1 // pred_region
      _
    $region21: #{tsn_forward.1} parent=1 // pred_fallthru
      _
    // Predicated region
    $region22: #{tsn_forward.1} parent=1 // pred_check
      _
    $region23: #{tsn_forward.1} parent=1 // pred_check_branch
      %23 = sbr.rel (0) target = $region25
    $region24: #{tsn_forward.1} parent=1 // pred_region
      _
    $region25: #{tsn_forward.1} parent=1 // pred_fallthru
      _
    %v25 = vld [vmem:[%s0] sm:$0xf]
    %v26 = vld [vmem:[%s0 + $0x4] sm:$0xf]
    %v27 = vld [vmem:[%s0 + $0x8] sm:$0xf]
    %v28 = vld [vmem:[%s0 + $0xc] sm:$0xf]
    %v29 = vld [vmem:[%s0 + $0x10] sm:$0xf]
    %v30 = vld [vmem:[%s0 + $0x14] sm:$0xf]
    %v31 = vld [vmem:[%s0 + $0x18] sm:$0xf]
    %v32 = vld [vmem:[%s0 + $0x1c] sm:$0xf]
    %v33 = vld [vmem:[%s0 + $0x20] sm:$0xf]
    %v34 = vld [vmem:[%s0 + $0x24] sm:$0xf]
    %v35 = vld [vmem:[%s0 + $0x28] sm:$0xf]
    %v36 = vld [vmem:[%s0 + $0x2c] sm:$0xf]
    %v37 = vld [vmem:[%s0 + $0x30] sm:$0xf]
    %v38 = vld [vmem:[%s0 + $0x34] sm:$0xf]
    %v39 = vld [vmem:[%s0 + $0x38] sm:$0xf]
    %v40 = vld [vmem:[%s0 + $0x3c] sm:$0xf]
    %v41 = vld [vmem:[%s0 + $0x40] sm:$0xf]
    %v42 = vld [vmem:[%s0 + $0x44] sm:$0xf]
    %v43 = vld [vmem:[%s0 + $0x48] sm:$0xf]
    %v44 = vld [vmem:[%s0 + $0x4c] sm:$0xf]
    %v45 = vld [vmem:[%s0 + $0x50] sm:$0xf]
    %v46 = vld [vmem:[%s0 + $0x54] sm:$0xf]
    %v47 = vld [vmem:[%s0 + $0x58] sm:$0xf]
    %v48 = vld [vmem:[%s0 + $0x5c] sm:$0xf]
    %v49 = vld [vmem:[%s0 + $0x60] sm:$0xf]
    %v50 = vld [vmem:[%s0 + $0x64] sm:$0xf]
    %v51 = vld [vmem:[%s0 + $0x68] sm:$0xf]
    %v52 = vld [vmem:[%s0 + $0x6c] sm:$0xf]
    %v53 = vld [vmem:[%s0 + $0x70] sm:$0xf]
    %v54 = vld [vmem:[%s0 + $0x74] sm:$0xf]
    %v55 = vld [vmem:[%s0 + $0x78] sm:$0xf]
    %v56 = vld [vmem:[%s0 + $0x7c] sm:$0xf]
    %v57 = vld [vmem:[%s0 + $0x80] sm:$0xf]
    %v58 = vld [vmem:[%s0 + $0x84] sm:$0xf]
    %v59 = vld [vmem:[%s0 + $0x88] sm:$0xf]
    %v60 = vld [vmem:[%s0 + $0x8c] sm:$0xf]
    %v61 = vld [vmem:[%s0 + $0x90] sm:$0xf]
    %v62 = vld [vmem:[%s0 + $0x94] sm:$0xf]
    %v63 = vld [vmem:[%s0 + $0x98] sm:$0xf]
    %v64 = vld [vmem:[%s0 + $0x9c] sm:$0xf]
    %v65 = vld [vmem:[%s0 + $0xa0] sm:$0xf]
    %v66 = vld [vmem:[%s0 + $0xa4] sm:$0xf]
    %v67 = vld [vmem:[%s0 + $0xa8] sm:$0xf]
    %v68 = vld [vmem:[%s0 + $0xac] sm:$0xf]
    %v69 = vld [vmem:[%s0 + $0xb0] sm:$0xf]
    %v70 = vld [vmem:[%s0 + $0xb4] sm:$0xf]
    %v71 = vld [vmem:[%s0 + $0xb8] sm:$0xf]
    %v72 = vld [vmem:[%s0 + $0xbc] sm:$0xf]
    %v73 = vld [vmem:[%s0 + $0xc0] sm:$0xf]
    %v74 = vld [vmem:[%s0 + $0xc4] sm:$0xf]
    %v75 = vld [vmem:[%s0 + $0xc8] sm:$0xf]
    %v76 = vld [vmem:[%s0 + $0xcc] sm:$0xf]
    %v77 = vld [vmem:[%s0 + $0xd0] sm:$0xf]
    %v78 = vld [vmem:[%s0 + $0xd4] sm:$0xf]
    %v79 = vld [vmem:[%s0 + $0xd8] sm:$0xf]
    %v80 = vld [vmem:[%s0 + $0xdc] sm:$0xf]
    %v81 = vld [vmem:[%s0 + $0xe0] sm:$0xf]
    %v82 = vld [vmem:[%s0 + $0xe4] sm:$0xf]
    %v83 = vld [vmem:[%s0 + $0xe8] sm:$0xf]
    %v84 = vld [vmem:[%s0 + $0xec] sm:$0xf]
    %v85 = vld [vmem:[%s0 + $0xf0] sm:$0xf]
    %v86 = vld [vmem:[%s0 + $0xf4] sm:$0xf]
    %v87 = vld [vmem:[%s0 + $0xf8] sm:$0xf]
    %v88 = vld [vmem:[%s0 + $0xfc] sm:$0xf]
    %v89 = vld [vmem:[%s0 + $0x100] sm:$0xf]
    %v90 = vld [vmem:[%s0 + $0x104] sm:$0xf]
    %v91 = vld [vmem:[%s0 + $0x108] sm:$0xf]
    %v92 = vld [vmem:[%s0 + $0x10c] sm:$0xf]
    %v93 = vld [vmem:[%s0 + $0x110] sm:$0xf]
    %v94 = vld [vmem:[%s0 + $0x114] sm:$0xf]
    %v95 = vld [vmem:[%s0 + $0x118] sm:$0xf]
    %v96 = vld [vmem:[%s0 + $0x11c] sm:$0xf]
    %v97 = vld [vmem:[%s0 + $0x120] sm:$0xf]
    %v98 = vld [vmem:[%s0 + $0x124] sm:$0xf]
    %v99 = vld [vmem:[%s0 + $0x128] sm:$0xf]
    %v100 = vld [vmem:[%s0 + $0x12c] sm:$0xf]
    %v101 = vld [vmem:[%s0 + $0x130] sm:$0xf]
    %v102 = vld [vmem:[%s0 + $0x134] sm:$0xf]
    %v103 = vld [vmem:[%s0 + $0x138] sm:$0xf]
    %v104 = vld [vmem:[%s0 + $0x13c] sm:$0xf]
    %v105 = vld [vmem:[%s0 + $0x140] sm:$0xf]
    %v106 = vld [vmem:[%s0 + $0x144] sm:$0xf]
    %v107 = vld [vmem:[%s0 + $0x148] sm:$0xf]
    %v108 = vld [vmem:[%s0 + $0x14c] sm:$0xf]
    %v109 = vld [vmem:[%s0 + $0x150] sm:$0xf]
    %v110 = vld [vmem:[%s0 + $0x154] sm:$0xf]
    %v111 = vld [vmem:[%s0 + $0x158] sm:$0xf]
    %v112 = vld [vmem:[%s0 + $0x15c] sm:$0xf]
    %v113 = vld [vmem:[%s0 + $0x160] sm:$0xf]
    %v114 = vld [vmem:[%s0 + $0x164] sm:$0xf]
    %v115 = vld [vmem:[%s0 + $0x168] sm:$0xf]
    %v116 = vld [vmem:[%s0 + $0x16c] sm:$0xf]
    %v117 = vld [vmem:[%s0 + $0x170] sm:$0xf]
    %v118 = vld [vmem:[%s0 + $0x174] sm:$0xf]
    %v119 = vld [vmem:[%s0 + $0x178] sm:$0xf]
    %v120 = vld [vmem:[%s0 + $0x17c] sm:$0xf]
    %v121 = vld [vmem:[%s0 + $0x180] sm:$0xf]
    %v122 = vld [vmem:[%s0 + $0x184] sm:$0xf]
    %v123 = vld [vmem:[%s0 + $0x188] sm:$0xf]
    %v124 = vld [vmem:[%s0 + $0x18c] sm:$0xf]
    %v125 = vld [vmem:[%s0 + $0x190] sm:$0xf]
    %v126 = vld [vmem:[%s0 + $0x194] sm:$0xf]
    %v127 = vld [vmem:[%s0 + $0x198] sm:$0xf]
    %v128 = vld [vmem:[%s0 + $0x19c] sm:$0xf]
    %v129 = vld [vmem:[%s0 + $0x1a0] sm:$0xf]
    %v130 = vld [vmem:[%s0 + $0x1a4] sm:$0xf]
    %v131 = vld [vmem:[%s0 + $0x1a8] sm:$0xf]
    %v132 = vld [vmem:[%s0 + $0x1ac] sm:$0xf]
    %v133 = vld [vmem:[%s0 + $0x1b0] sm:$0xf]
    %v134 = vld [vmem:[%s0 + $0x1b4] sm:$0xf]
    %v135 = vld [vmem:[%s0 + $0x1b8] sm:$0xf]
    %v136 = vld [vmem:[%s0 + $0x1bc] sm:$0xf]
    %v137 = vld [vmem:[%s0 + $0x1c0] sm:$0xf]
    %v138 = vld [vmem:[%s0 + $0x1c4] sm:$0xf]
    %v139 = vld [vmem:[%s0 + $0x1c8] sm:$0xf]
    %v140 = vld [vmem:[%s0 + $0x1cc] sm:$0xf]
    %v141 = vld [vmem:[%s0 + $0x1d0] sm:$0xf]
    %v142 = vld [vmem:[%s0 + $0x1d4] sm:$0xf]
    %v143 = vld [vmem:[%s0 + $0x1d8] sm:$0xf]
    %v144 = vld [vmem:[%s0 + $0x1dc] sm:$0xf]
    %v145 = vld [vmem:[%s0 + $0x1e0] sm:$0xf]
    %v146 = vld [vmem:[%s0 + $0x1e4] sm:$0xf]
    %v147 = vld [vmem:[%s0 + $0x1e8] sm:$0xf]
    %v148 = vld [vmem:[%s0 + $0x1ec] sm:$0xf]
    %v149 = vld [vmem:[%s0 + $0x1f0] sm:$0xf]
    %v150 = vld [vmem:[%s0 + $0x1f4] sm:$0xf]
    %v151 = vld [vmem:[%s0 + $0x1f8] sm:$0xf]
    %v152 = vld [vmem:[%s0 + $0x1fc] sm:$0xf]
    %v153 = vld [vmem:[%s0 + $0x200] sm:$0xf]
    %v154 = vld [vmem:[%s0 + $0x204] sm:$0xf]
    %v155 = vld [vmem:[%s0 + $0x208] sm:$0xf]
    %v156 = vld [vmem:[%s0 + $0x20c] sm:$0xf]
    %v157 = vld [vmem:[%s0 + $0x210] sm:$0xf]
    %v158 = vld [vmem:[%s0 + $0x214] sm:$0xf]
    %v159 = vld [vmem:[%s0 + $0x218] sm:$0xf]
    %v160 = vld [vmem:[%s0 + $0x21c] sm:$0xf]
    %v161 = vld [vmem:[%s0 + $0x220] sm:$0xf]
    %v162 = vld [vmem:[%s0 + $0x224] sm:$0xf]
    %v163 = vld [vmem:[%s0 + $0x228] sm:$0xf]
    %v164 = vld [vmem:[%s0 + $0x22c] sm:$0xf]
    %v165 = vld [vmem:[%s0 + $0x230] sm:$0xf]
    %v166 = vld [vmem:[%s0 + $0x234] sm:$0xf]
    %v167 = vld [vmem:[%s0 + $0x238] sm:$0xf]
    %v168 = vld [vmem:[%s0 + $0x23c] sm:$0xf]
    %v169 = vld [vmem:[%s0 + $0x240] sm:$0xf]
    %v170 = vld [vmem:[%s0 + $0x244] sm:$0xf]
    %v171 = vld [vmem:[%s0 + $0x248] sm:$0xf]
    %v172 = vld [vmem:[%s0 + $0x24c] sm:$0xf]
    %v173 = vld [vmem:[%s0 + $0x250] sm:$0xf]
    %v174 = vld [vmem:[%s0 + $0x254] sm:$0xf]
    %v175 = vld [vmem:[%s0 + $0x258] sm:$0xf]
    %v176 = vld [vmem:[%s0 + $0x25c] sm:$0xf]
    %v177 = vld [vmem:[%s0 + $0x260] sm:$0xf]
    %v178 = vld [vmem:[%s0 + $0x264] sm:$0xf]
    %v179 = vld [vmem:[%s0 + $0x268] sm:$0xf]
    %v180 = vld [vmem:[%s0 + $0x26c] sm:$0xf]
    %v181 = vld [vmem:[%s0 + $0x270] sm:$0xf]
    %v182 = vld [vmem:[%s0 + $0x274] sm:$0xf]
    %v183 = vld [vmem:[%s0 + $0x278] sm:$0xf]
    %v184 = vld [vmem:[%s0 + $0x27c] sm:$0xf]
    %v185 = vld [vmem:[%s0 + $0x280] sm:$0xf]
    %v186 = vld [vmem:[%s0 + $0x284] sm:$0xf]
    %v187 = vld [vmem:[%s0 + $0x288] sm:$0xf]
    %v188 = vld [vmem:[%s0 + $0x28c] sm:$0xf]
    %v189 = vld [vmem:[%s0 + $0x290] sm:$0xf]
    %v190 = vld [vmem:[%s0 + $0x294] sm:$0xf]
    %v191 = vld [vmem:[%s0 + $0x298] sm:$0xf]
    %v192 = vld [vmem:[%s0 + $0x29c] sm:$0xf]
    %v193 = vld [vmem:[%s0 + $0x2a0] sm:$0xf]
    %v194 = vld [vmem:[%s0 + $0x2a4] sm:$0xf]
    %v195 = vld [vmem:[%s0 + $0x2a8] sm:$0xf]
    %v196 = vld [vmem:[%s0 + $0x2ac] sm:$0xf]
    %v197 = vld [vmem:[%s0 + $0x2b0] sm:$0xf]
    %v198 = vld [vmem:[%s0 + $0x2b4] sm:$0xf]
    %v199 = vld [vmem:[%s0 + $0x2b8] sm:$0xf]
    %v200 = vld [vmem:[%s0 + $0x2bc] sm:$0xf]
    %v201 = vld [vmem:[%s0 + $0x2c0] sm:$0xf]
    %v202 = vld [vmem:[%s0 + $0x2c4] sm:$0xf]
    %v203 = vld [vmem:[%s0 + $0x2c8] sm:$0xf]
    %v204 = vld [vmem:[%s0 + $0x2cc] sm:$0xf]
    %v205 = vld [vmem:[%s0 + $0x2d0] sm:$0xf]
    %v206 = vld [vmem:[%s0 + $0x2d4] sm:$0xf]
    %v207 = vld [vmem:[%s0 + $0x2d8] sm:$0xf]
    %v208 = vld [vmem:[%s0 + $0x2dc] sm:$0xf]
    %v209 = vld [vmem:[%s0 + $0x2e0] sm:$0xf]
    %v210 = vld [vmem:[%s0 + $0x2e4] sm:$0xf]
    %v211 = vld [vmem:[%s0 + $0x2e8] sm:$0xf]
    %v212 = vld [vmem:[%s0 + $0x2ec] sm:$0xf]
    %v213 = vld [vmem:[%s0 + $0x2f0] sm:$0xf]
    %v214 = vld [vmem:[%s0 + $0x2f4] sm:$0xf]
    %v215 = vld [vmem:[%s0 + $0x2f8] sm:$0xf]
    %v216 = vld [vmem:[%s0 + $0x2fc] sm:$0xf]
    %v217 = vld [vmem:[%s0 + $0x300] sm:$0xf]
    %v218 = vld [vmem:[%s0 + $0x304] sm:$0xf]
    %v219 = vld [vmem:[%s0 + $0x308] sm:$0xf]
    %v220 = vld [vmem:[%s0 + $0x30c] sm:$0xf]
    %v221 = vld [vmem:[%s0 + $0x310] sm:$0xf]
    %v222 = vld [vmem:[%s0 + $0x314] sm:$0xf]
    %v223 = vld [vmem:[%s0 + $0x318] sm:$0xf]
    %v224 = vld [vmem:[%s0 + $0x31c] sm:$0xf]
    %v225 = vld [vmem:[%s0 + $0x320] sm:$0xf]
    %v226 = vld [vmem:[%s0 + $0x324] sm:$0xf]
    %v227 = vld [vmem:[%s0 + $0x328] sm:$0xf]
    %v228 = vld [vmem:[%s0 + $0x32c] sm:$0xf]
    %v229 = vld [vmem:[%s0 + $0x330] sm:$0xf]
    %v230 = vld [vmem:[%s0 + $0x334] sm:$0xf]
    %v231 = vld [vmem:[%s0 + $0x338] sm:$0xf]
    %v232 = vld [vmem:[%s0 + $0x33c] sm:$0xf]
    %v233 = vld [vmem:[%s0 + $0x340] sm:$0xf]
    %v234 = vld [vmem:[%s0 + $0x344] sm:$0xf]
    %v235 = vld [vmem:[%s0 + $0x348] sm:$0xf]
    %v236 = vld [vmem:[%s0 + $0x34c] sm:$0xf]
    %v237 = vld [vmem:[%s0 + $0x350] sm:$0xf]
    %v238 = vld [vmem:[%s0 + $0x354] sm:$0xf]
    %v239 = vld [vmem:[%s0 + $0x358] sm:$0xf]
    %v240 = vld [vmem:[%s0 + $0x35c] sm:$0xf]
    %v241 = vld [vmem:[%s0 + $0x360] sm:$0xf]
    %v242 = vld [vmem:[%s0 + $0x364] sm:$0xf]
    %v243 = vld [vmem:[%s0 + $0x368] sm:$0xf]
    %v244 = vld [vmem:[%s0 + $0x36c] sm:$0xf]
    %v245 = vld [vmem:[%s0 + $0x370] sm:$0xf]
    %v246 = vld [vmem:[%s0 + $0x374] sm:$0xf]
    %v247 = vld [vmem:[%s0 + $0x378] sm:$0xf]
    %v248 = vld [vmem:[%s0 + $0x37c] sm:$0xf]
    %v249 = vld [vmem:[%s0 + $0x380] sm:$0xf]
    %v250 = vld [vmem:[%s0 + $0x384] sm:$0xf]
    %v251 = vld [vmem:[%s0 + $0x388] sm:$0xf]
    %v252 = vld [vmem:[%s0 + $0x38c] sm:$0xf]
    %v253 = vld [vmem:[%s0 + $0x390] sm:$0xf]
    %v254 = vld [vmem:[%s0 + $0x394] sm:$0xf]
    %v255 = vld [vmem:[%s0 + $0x398] sm:$0xf]
    %v256 = vld [vmem:[%s0 + $0x39c] sm:$0xf]
    %v257 = vld [vmem:[%s0 + $0x3a0] sm:$0xf]
    %v258 = vld [vmem:[%s0 + $0x3a4] sm:$0xf]
    %v259 = vld [vmem:[%s0 + $0x3a8] sm:$0xf]
    %v260 = vld [vmem:[%s0 + $0x3ac] sm:$0xf]
    %v261 = vld [vmem:[%s0 + $0x3b0] sm:$0xf]
    %v262 = vld [vmem:[%s0 + $0x3b4] sm:$0xf]
    %v263 = vld [vmem:[%s0 + $0x3b8] sm:$0xf]
    %v264 = vld [vmem:[%s0 + $0x3bc] sm:$0xf]
    %v265 = vld [vmem:[%s0 + $0x3c0] sm:$0xf]
    %v266 = vld [vmem:[%s0 + $0x3c4] sm:$0xf]
    %v267 = vld [vmem:[%s0 + $0x3c8] sm:$0xf]
    %v268 = vld [vmem:[%s0 + $0x3cc] sm:$0xf]
    %v269 = vld [vmem:[%s0 + $0x3d0] sm:$0xf]
    %v270 = vld [vmem:[%s0 + $0x3d4] sm:$0xf]
    %v271 = vld [vmem:[%s0 + $0x3d8] sm:$0xf]
    %v272 = vld [vmem:[%s0 + $0x3dc] sm:$0xf]
    %v273 = vld [vmem:[%s0 + $0x3e0] sm:$0xf]
    %v274 = vld [vmem:[%s0 + $0x3e4] sm:$0xf]
    %v275 = vld [vmem:[%s0 + $0x3e8] sm:$0xf]
    %v276 = vld [vmem:[%s0 + $0x3ec] sm:$0xf]
    %v277 = vld [vmem:[%s0 + $0x3f0] sm:$0xf]
    %v278 = vld [vmem:[%s0 + $0x3f4] sm:$0xf]
    %v279 = vld [vmem:[%s0 + $0x3f8] sm:$0xf]
    %v280 = vld [vmem:[%s0 + $0x3fc] sm:$0xf]
    %v281 = vld [vmem:[%s1] sm:$0xf]
    %v282 = vld [vmem:[%s1 + $0x4] sm:$0xf]
    %v283 = vld [vmem:[%s1 + $0x8] sm:$0xf]
    %v284 = vld [vmem:[%s1 + $0xc] sm:$0xf]
    %v285 = vld [vmem:[%s1 + $0x10] sm:$0xf]
    %v286 = vld [vmem:[%s1 + $0x14] sm:$0xf]
    %v287 = vld [vmem:[%s1 + $0x18] sm:$0xf]
    %v288 = vld [vmem:[%s1 + $0x1c] sm:$0xf]
    %v289 = vld [vmem:[%s1 + $0x20] sm:$0xf]
    %v290 = vld [vmem:[%s1 + $0x24] sm:$0xf]
    %v291 = vld [vmem:[%s1 + $0x28] sm:$0xf]
    %v292 = vld [vmem:[%s1 + $0x2c] sm:$0xf]
    %v293 = vld [vmem:[%s1 + $0x30] sm:$0xf]
    %v294 = vld [vmem:[%s1 + $0x34] sm:$0xf]
    %v295 = vld [vmem:[%s1 + $0x38] sm:$0xf]
    %v296 = vld [vmem:[%s1 + $0x3c] sm:$0xf]
    %v297 = vld [vmem:[%s2] sm:$0x1]
    %v299 = vlaneseq
    %v300 = vshrl.u32 %v299, 7
    %v301 = vsub.s32 0, %v300
    %v302 = vrot.slane %v297, %v301
    %v560 = vunpack.c.l.b16 %v25
    %v561 = vunpack.c.l.b16 %v26
    %v562 = vunpack.c.l.b16 %v27
    %v563 = vunpack.c.l.b16 %v28
    %v564 = vunpack.c.l.b16 %v29
    %v565 = vunpack.c.l.b16 %v30
    %v566 = vunpack.c.l.b16 %v31
    %v567 = vunpack.c.l.b16 %v32
    %v568 = vunpack.c.l.b16 %v33
    %v569 = vunpack.c.l.b16 %v34
    %v570 = vunpack.c.l.b16 %v35
    %v571 = vunpack.c.l.b16 %v36
    %v572 = vunpack.c.l.b16 %v37
    %v573 = vunpack.c.l.b16 %v38
    %v574 = vunpack.c.l.b16 %v39
    %v575 = vunpack.c.l.b16 %v40
    %v576 = vunpack.c.l.b16 %v41
    %v577 = vunpack.c.l.b16 %v42
    %v578 = vunpack.c.l.b16 %v43
    %v579 = vunpack.c.l.b16 %v44
    %v580 = vunpack.c.l.b16 %v45
    %v581 = vunpack.c.l.b16 %v46
    %v582 = vunpack.c.l.b16 %v47
    %v583 = vunpack.c.l.b16 %v48
    %v584 = vunpack.c.l.b16 %v49
    %v585 = vunpack.c.l.b16 %v50
    %v586 = vunpack.c.l.b16 %v51
    %v587 = vunpack.c.l.b16 %v52
    %v588 = vunpack.c.l.b16 %v53
    %v589 = vunpack.c.l.b16 %v54
    %v590 = vunpack.c.l.b16 %v55
    %v591 = vunpack.c.l.b16 %v56
    %v592 = vunpack.c.l.b16 %v57
    %v593 = vunpack.c.l.b16 %v58
    %v594 = vunpack.c.l.b16 %v59
    %v595 = vunpack.c.l.b16 %v60
    %v596 = vunpack.c.l.b16 %v61
    %v597 = vunpack.c.l.b16 %v62
    %v598 = vunpack.c.l.b16 %v63
    %v599 = vunpack.c.l.b16 %v64
    %v600 = vunpack.c.l.b16 %v65
    %v601 = vunpack.c.l.b16 %v66
    %v602 = vunpack.c.l.b16 %v67
    %v603 = vunpack.c.l.b16 %v68
    %v604 = vunpack.c.l.b16 %v69
    %v605 = vunpack.c.l.b16 %v70
    %v606 = vunpack.c.l.b16 %v71
    %v607 = vunpack.c.l.b16 %v72
    %v608 = vunpack.c.l.b16 %v73
    %v609 = vunpack.c.l.b16 %v74
    %v610 = vunpack.c.l.b16 %v75
    %v611 = vunpack.c.l.b16 %v76
    %v612 = vunpack.c.l.b16 %v77
    %v613 = vunpack.c.l.b16 %v78
    %v614 = vunpack.c.l.b16 %v79
    %v615 = vunpack.c.l.b16 %v80
    %v616 = vunpack.c.l.b16 %v81
    %v617 = vunpack.c.l.b16 %v82
    %v618 = vunpack.c.l.b16 %v83
    %v619 = vunpack.c.l.b16 %v84
    %v620 = vunpack.c.l.b16 %v85
    %v621 = vunpack.c.l.b16 %v86
    %v622 = vunpack.c.l.b16 %v87
    %v623 = vunpack.c.l.b16 %v88
    %v624 = vunpack.c.l.b16 %v89
    %v625 = vunpack.c.l.b16 %v90
    %v626 = vunpack.c.l.b16 %v91
    %v627 = vunpack.c.l.b16 %v92
    %v628 = vunpack.c.l.b16 %v93
    %v629 = vunpack.c.l.b16 %v94
    %v630 = vunpack.c.l.b16 %v95
    %v631 = vunpack.c.l.b16 %v96
    %v632 = vunpack.c.l.b16 %v97
    %v633 = vunpack.c.l.b16 %v98
    %v634 = vunpack.c.l.b16 %v99
    %v635 = vunpack.c.l.b16 %v100
    %v636 = vunpack.c.l.b16 %v101
    %v637 = vunpack.c.l.b16 %v102
    %v638 = vunpack.c.l.b16 %v103
    %v639 = vunpack.c.l.b16 %v104
    %v640 = vunpack.c.l.b16 %v105
    %v641 = vunpack.c.l.b16 %v106
    %v642 = vunpack.c.l.b16 %v107
    %v643 = vunpack.c.l.b16 %v108
    %v644 = vunpack.c.l.b16 %v109
    %v645 = vunpack.c.l.b16 %v110
    %v646 = vunpack.c.l.b16 %v111
    %v647 = vunpack.c.l.b16 %v112
    %v648 = vunpack.c.l.b16 %v113
    %v649 = vunpack.c.l.b16 %v114
    %v650 = vunpack.c.l.b16 %v115
    %v651 = vunpack.c.l.b16 %v116
    %v652 = vunpack.c.l.b16 %v117
    %v653 = vunpack.c.l.b16 %v118
    %v654 = vunpack.c.l.b16 %v119
    %v655 = vunpack.c.l.b16 %v120
    %v656 = vunpack.c.l.b16 %v121
    %v657 = vunpack.c.l.b16 %v122
    %v658 = vunpack.c.l.b16 %v123
    %v659 = vunpack.c.l.b16 %v124
    %v660 = vunpack.c.l.b16 %v125
    %v661 = vunpack.c.l.b16 %v126
    %v662 = vunpack.c.l.b16 %v127
    %v663 = vunpack.c.l.b16 %v128
    %v664 = vunpack.c.l.b16 %v129
    %v665 = vunpack.c.l.b16 %v130
    %v666 = vunpack.c.l.b16 %v131
    %v667 = vunpack.c.l.b16 %v132
    %v668 = vunpack.c.l.b16 %v133
    %v669 = vunpack.c.l.b16 %v134
    %v670 = vunpack.c.l.b16 %v135
    %v671 = vunpack.c.l.b16 %v136
    %v672 = vunpack.c.l.b16 %v137
    %v673 = vunpack.c.l.b16 %v138
    %v674 = vunpack.c.l.b16 %v139
    %v675 = vunpack.c.l.b16 %v140
    %v676 = vunpack.c.l.b16 %v141
    %v677 = vunpack.c.l.b16 %v142
    %v678 = vunpack.c.l.b16 %v143
    %v679 = vunpack.c.l.b16 %v144
    %v680 = vunpack.c.l.b16 %v145
    %v681 = vunpack.c.l.b16 %v146
    %v682 = vunpack.c.l.b16 %v147
    %v683 = vunpack.c.l.b16 %v148
    %v684 = vunpack.c.l.b16 %v149
    %v685 = vunpack.c.l.b16 %v150
    %v686 = vunpack.c.l.b16 %v151
    %v687 = vunpack.c.l.b16 %v152
    %v688 = vunpack.c.l.b16 %v153
    %v689 = vunpack.c.l.b16 %v154
    %v690 = vunpack.c.l.b16 %v155
    %v691 = vunpack.c.l.b16 %v156
    %v692 = vunpack.c.l.b16 %v157
    %v693 = vunpack.c.l.b16 %v158
    %v694 = vunpack.c.l.b16 %v159
    %v695 = vunpack.c.l.b16 %v160
    %v696 = vunpack.c.l.b16 %v161
    %v697 = vunpack.c.l.b16 %v162
    %v698 = vunpack.c.l.b16 %v163
    %v699 = vunpack.c.l.b16 %v164
    %v700 = vunpack.c.l.b16 %v165
    %v701 = vunpack.c.l.b16 %v166
    %v702 = vunpack.c.l.b16 %v167
    %v703 = vunpack.c.l.b16 %v168
    %v704 = vunpack.c.l.b16 %v169
    %v705 = vunpack.c.l.b16 %v170
    %v706 = vunpack.c.l.b16 %v171
    %v707 = vunpack.c.l.b16 %v172
    %v708 = vunpack.c.l.b16 %v173
    %v709 = vunpack.c.l.b16 %v174
    %v710 = vunpack.c.l.b16 %v175
    %v711 = vunpack.c.l.b16 %v176
    %v712 = vunpack.c.l.b16 %v177
    %v713 = vunpack.c.l.b16 %v178
    %v714 = vunpack.c.l.b16 %v179
    %v715 = vunpack.c.l.b16 %v180
    %v716 = vunpack.c.l.b16 %v181
    %v717 = vunpack.c.l.b16 %v182
    %v718 = vunpack.c.l.b16 %v183
    %v719 = vunpack.c.l.b16 %v184
    %v720 = vunpack.c.l.b16 %v185
    %v721 = vunpack.c.l.b16 %v186
    %v722 = vunpack.c.l.b16 %v187
    %v723 = vunpack.c.l.b16 %v188
    %v724 = vunpack.c.l.b16 %v189
    %v725 = vunpack.c.l.b16 %v190
    %v726 = vunpack.c.l.b16 %v191
    %v727 = vunpack.c.l.b16 %v192
    %v728 = vunpack.c.l.b16 %v193
    %v729 = vunpack.c.l.b16 %v194
    %v730 = vunpack.c.l.b16 %v195
    %v731 = vunpack.c.l.b16 %v196
    %v732 = vunpack.c.l.b16 %v197
    %v733 = vunpack.c.l.b16 %v198
    %v734 = vunpack.c.l.b16 %v199
    %v735 = vunpack.c.l.b16 %v200
    %v736 = vunpack.c.l.b16 %v201
    %v737 = vunpack.c.l.b16 %v202
    %v738 = vunpack.c.l.b16 %v203
    %v739 = vunpack.c.l.b16 %v204
    %v740 = vunpack.c.l.b16 %v205
    %v741 = vunpack.c.l.b16 %v206
    %v742 = vunpack.c.l.b16 %v207
    %v743 = vunpack.c.l.b16 %v208
    %v744 = vunpack.c.l.b16 %v209
    %v745 = vunpack.c.l.b16 %v210
    %v746 = vunpack.c.l.b16 %v211
    %v747 = vunpack.c.l.b16 %v212
    %v748 = vunpack.c.l.b16 %v213
    %v749 = vunpack.c.l.b16 %v214
    %v750 = vunpack.c.l.b16 %v215
    %v751 = vunpack.c.l.b16 %v216
    %v752 = vunpack.c.l.b16 %v217
    %v753 = vunpack.c.l.b16 %v218
    %v754 = vunpack.c.l.b16 %v219
    %v755 = vunpack.c.l.b16 %v220
    %v756 = vunpack.c.l.b16 %v221
    %v757 = vunpack.c.l.b16 %v222
    %v758 = vunpack.c.l.b16 %v223
    %v759 = vunpack.c.l.b16 %v224
    %v760 = vunpack.c.l.b16 %v225
    %v761 = vunpack.c.l.b16 %v226
    %v762 = vunpack.c.l.b16 %v227
    %v763 = vunpack.c.l.b16 %v228
    %v764 = vunpack.c.l.b16 %v229
    %v765 = vunpack.c.l.b16 %v230
    %v766 = vunpack.c.l.b16 %v231
    %v767 = vunpack.c.l.b16 %v232
    %v768 = vunpack.c.l.b16 %v233
    %v769 = vunpack.c.l.b16 %v234
    %v770 = vunpack.c.l.b16 %v235
    %v771 = vunpack.c.l.b16 %v236
    %v772 = vunpack.c.l.b16 %v237
    %v773 = vunpack.c.l.b16 %v238
    %v774 = vunpack.c.l.b16 %v239
    %v775 = vunpack.c.l.b16 %v240
    %v776 = vunpack.c.l.b16 %v241
    %v777 = vunpack.c.l.b16 %v242
    %v778 = vunpack.c.l.b16 %v243
    %v779 = vunpack.c.l.b16 %v244
    %v780 = vunpack.c.l.b16 %v245
    %v781 = vunpack.c.l.b16 %v246
    %v782 = vunpack.c.l.b16 %v247
    %v783 = vunpack.c.l.b16 %v248
    %v784 = vunpack.c.l.b16 %v249
    %v785 = vunpack.c.l.b16 %v250
    %v786 = vunpack.c.l.b16 %v251
    %v787 = vunpack.c.l.b16 %v252
    %v788 = vunpack.c.l.b16 %v253
    %v789 = vunpack.c.l.b16 %v254
    %v790 = vunpack.c.l.b16 %v255
    %v791 = vunpack.c.l.b16 %v256
    %v792 = vunpack.c.l.b16 %v257
    %v793 = vunpack.c.l.b16 %v258
    %v794 = vunpack.c.l.b16 %v259
    %v795 = vunpack.c.l.b16 %v260
    %v796 = vunpack.c.l.b16 %v261
    %v797 = vunpack.c.l.b16 %v262
    %v798 = vunpack.c.l.b16 %v263
    %v799 = vunpack.c.l.b16 %v264
    %v800 = vunpack.c.l.b16 %v265
    %v801 = vunpack.c.l.b16 %v266
    %v802 = vunpack.c.l.b16 %v267
    %v803 = vunpack.c.l.b16 %v268
    %v804 = vunpack.c.l.b16 %v269
    %v805 = vunpack.c.l.b16 %v270
    %v806 = vunpack.c.l.b16 %v271
    %v807 = vunpack.c.l.b16 %v272
    %v808 = vunpack.c.l.b16 %v273
    %v809 = vunpack.c.l.b16 %v274
    %v810 = vunpack.c.l.b16 %v275
    %v811 = vunpack.c.l.b16 %v276
    %v812 = vunpack.c.l.b16 %v277
    %v813 = vunpack.c.l.b16 %v278
    %v814 = vunpack.c.l.b16 %v279
    %v815 = vunpack.c.l.b16 %v280
    %v816 = vpack.c.b16 %v561, %v560
    %v817 = vpack.c.b16 %v563, %v562
    %v818 = vpack.c.b16 %v565, %v564
    %v819 = vpack.c.b16 %v567, %v566
    %v820 = vpack.c.b16 %v569, %v568
    %v821 = vpack.c.b16 %v571, %v570
    %v822 = vpack.c.b16 %v573, %v572
    %v823 = vpack.c.b16 %v575, %v574
    %v824 = vpack.c.b16 %v577, %v576
    %v825 = vpack.c.b16 %v579, %v578
    %v826 = vpack.c.b16 %v581, %v580
    %v827 = vpack.c.b16 %v583, %v582
    %v828 = vpack.c.b16 %v585, %v584
    %v829 = vpack.c.b16 %v587, %v586
    %v830 = vpack.c.b16 %v589, %v588
    %v831 = vpack.c.b16 %v591, %v590
    %v832 = vpack.c.b16 %v593, %v592
    %v833 = vpack.c.b16 %v595, %v594
    %v834 = vpack.c.b16 %v597, %v596
    %v835 = vpack.c.b16 %v599, %v598
    %v836 = vpack.c.b16 %v601, %v600
    %v837 = vpack.c.b16 %v603, %v602
    %v838 = vpack.c.b16 %v605, %v604
    %v839 = vpack.c.b16 %v607, %v606
    %v840 = vpack.c.b16 %v609, %v608
    %v841 = vpack.c.b16 %v611, %v610
    %v842 = vpack.c.b16 %v613, %v612
    %v843 = vpack.c.b16 %v615, %v614
    %v844 = vpack.c.b16 %v617, %v616
    %v845 = vpack.c.b16 %v619, %v618
    %v846 = vpack.c.b16 %v621, %v620
    %v847 = vpack.c.b16 %v623, %v622
    %v848 = vpack.c.b16 %v625, %v624
    %v849 = vpack.c.b16 %v627, %v626
    %v850 = vpack.c.b16 %v629, %v628
    %v851 = vpack.c.b16 %v631, %v630
    %v852 = vpack.c.b16 %v633, %v632
    %v853 = vpack.c.b16 %v635, %v634
    %v854 = vpack.c.b16 %v637, %v636
    %v855 = vpack.c.b16 %v639, %v638
    %v856 = vpack.c.b16 %v641, %v640
    %v857 = vpack.c.b16 %v643, %v642
    %v858 = vpack.c.b16 %v645, %v644
    %v859 = vpack.c.b16 %v647, %v646
    %v860 = vpack.c.b16 %v649, %v648
    %v861 = vpack.c.b16 %v651, %v650
    %v862 = vpack.c.b16 %v653, %v652
    %v863 = vpack.c.b16 %v655, %v654
    %v864 = vpack.c.b16 %v657, %v656
    %v865 = vpack.c.b16 %v659, %v658
    %v866 = vpack.c.b16 %v661, %v660
    %v867 = vpack.c.b16 %v663, %v662
    %v868 = vpack.c.b16 %v665, %v664
    %v869 = vpack.c.b16 %v667, %v666
    %v870 = vpack.c.b16 %v669, %v668
    %v871 = vpack.c.b16 %v671, %v670
    %v872 = vpack.c.b16 %v673, %v672
    %v873 = vpack.c.b16 %v675, %v674
    %v874 = vpack.c.b16 %v677, %v676
    %v875 = vpack.c.b16 %v679, %v678
    %v876 = vpack.c.b16 %v681, %v680
    %v877 = vpack.c.b16 %v683, %v682
    %v878 = vpack.c.b16 %v685, %v684
    %v879 = vpack.c.b16 %v687, %v686
    %v880 = vpack.c.b16 %v689, %v688
    %v881 = vpack.c.b16 %v691, %v690
    %v882 = vpack.c.b16 %v693, %v692
    %v883 = vpack.c.b16 %v695, %v694
    %v884 = vpack.c.b16 %v697, %v696
    %v885 = vpack.c.b16 %v699, %v698
    %v886 = vpack.c.b16 %v701, %v700
    %v887 = vpack.c.b16 %v703, %v702
    %v888 = vpack.c.b16 %v705, %v704
    %v889 = vpack.c.b16 %v707, %v706
    %v890 = vpack.c.b16 %v709, %v708
    %v891 = vpack.c.b16 %v711, %v710
    %v892 = vpack.c.b16 %v713, %v712
    %v893 = vpack.c.b16 %v715, %v714
    %v894 = vpack.c.b16 %v717, %v716
    %v895 = vpack.c.b16 %v719, %v718
    %v896 = vpack.c.b16 %v721, %v720
    %v897 = vpack.c.b16 %v723, %v722
    %v898 = vpack.c.b16 %v725, %v724
    %v899 = vpack.c.b16 %v727, %v726
    %v900 = vpack.c.b16 %v729, %v728
    %v901 = vpack.c.b16 %v731, %v730
    %v902 = vpack.c.b16 %v733, %v732
    %v903 = vpack.c.b16 %v735, %v734
    %v904 = vpack.c.b16 %v737, %v736
    %v905 = vpack.c.b16 %v739, %v738
    %v906 = vpack.c.b16 %v741, %v740
    %v907 = vpack.c.b16 %v743, %v742
    %v908 = vpack.c.b16 %v745, %v744
    %v909 = vpack.c.b16 %v747, %v746
    %v910 = vpack.c.b16 %v749, %v748
    %v911 = vpack.c.b16 %v751, %v750
    %v912 = vpack.c.b16 %v753, %v752
    %v913 = vpack.c.b16 %v755, %v754
    %v914 = vpack.c.b16 %v757, %v756
    %v915 = vpack.c.b16 %v759, %v758
    %v916 = vpack.c.b16 %v761, %v760
    %v917 = vpack.c.b16 %v763, %v762
    %v918 = vpack.c.b16 %v765, %v764
    %v919 = vpack.c.b16 %v767, %v766
    %v920 = vpack.c.b16 %v769, %v768
    %v921 = vpack.c.b16 %v771, %v770
    %v922 = vpack.c.b16 %v773, %v772
    %v923 = vpack.c.b16 %v775, %v774
    %v924 = vpack.c.b16 %v777, %v776
    %v925 = vpack.c.b16 %v779, %v778
    %v926 = vpack.c.b16 %v781, %v780
    %v927 = vpack.c.b16 %v783, %v782
    %v928 = vpack.c.b16 %v785, %v784
    %v929 = vpack.c.b16 %v787, %v786
    %v930 = vpack.c.b16 %v789, %v788
    %v931 = vpack.c.b16 %v791, %v790
    %v932 = vpack.c.b16 %v793, %v792
    %v933 = vpack.c.b16 %v795, %v794
    %v934 = vpack.c.b16 %v797, %v796
    %v935 = vpack.c.b16 %v799, %v798
    %v936 = vpack.c.b16 %v801, %v800
    %v937 = vpack.c.b16 %v803, %v802
    %v938 = vpack.c.b16 %v805, %v804
    %v939 = vpack.c.b16 %v807, %v806
    %v940 = vpack.c.b16 %v809, %v808
    %v941 = vpack.c.b16 %v811, %v810
    %v942 = vpack.c.b16 %v813, %v812
    %v943 = vpack.c.b16 %v815, %v814
    %v1088 = vunpack.c.l.b16 %v281
    %v1089 = vunpack.c.l.b16 %v282
    %v1090 = vunpack.c.l.b16 %v283
    %v1091 = vunpack.c.l.b16 %v284
    %v1092 = vunpack.c.l.b16 %v285
    %v1093 = vunpack.c.l.b16 %v286
    %v1094 = vunpack.c.l.b16 %v287
    %v1095 = vunpack.c.l.b16 %v288
    %v1096 = vunpack.c.l.b16 %v289
    %v1097 = vunpack.c.l.b16 %v290
    %v1098 = vunpack.c.l.b16 %v291
    %v1099 = vunpack.c.l.b16 %v292
    %v1100 = vunpack.c.l.b16 %v293
    %v1101 = vunpack.c.l.b16 %v294
    %v1102 = vunpack.c.l.b16 %v295
    %v1103 = vunpack.c.l.b16 %v296
    %v1104 = vpack.c.b16 %v1089, %v1088
    %v1105 = vpack.c.b16 %v1091, %v1090
    %v1106 = vpack.c.b16 %v1093, %v1092
    %v1107 = vpack.c.b16 %v1095, %v1094
    %v1108 = vpack.c.b16 %v1097, %v1096
    %v1109 = vpack.c.b16 %v1099, %v1098
    %v1110 = vpack.c.b16 %v1101, %v1100
    %v1111 = vpack.c.b16 %v1103, %v1102
    %1120 = vmatprep.subr.bf16.mxu0 0
    %1121 = vmatpush1.bf16.msra.mxu0 %v1111
    %1122 = vmatprep.subr.bf16.mxu0 0
    %1123 = vmatpush1.bf16.msra.mxu0 %v1110
    %1124 = vmatprep.subr.bf16.mxu0 0
    %1125 = vmatpush1.bf16.msra.mxu0 %v1109
    %1126 = vmatprep.subr.bf16.mxu0 0
    %1127 = vmatpush1.bf16.msra.mxu0 %v1108
    %1128 = vmatprep.subr.bf16.mxu0 0
    %1129 = vmatpush1.bf16.msra.mxu0 %v1107
    %1130 = vmatprep.subr.bf16.mxu0 0
    %1131 = vmatpush1.bf16.msra.mxu0 %v1106
    %1132 = vmatprep.subr.bf16.mxu0 0
    %1133 = vmatpush1.bf16.msra.mxu0 %v1105
    %1134 = vmatprep.subr.bf16.mxu0 0
    %1135 = vmatpush1.bf16.msra.mxu0 %v1104
    %1136 = vmatprep.subr.bf16.mxu0 0
    %1137 = vmatpush2.bf16.msra.mxu0 0
    %1138 = vmatprep.subr.bf16.mxu0 0
    %1139 = vmatpush2.bf16.msra.mxu0 0
    %1140 = vmatprep.subr.bf16.mxu0 0
    %1141 = vmatpush2.bf16.msra.mxu0 0
    %1142 = vmatprep.subr.bf16.mxu0 0
    %1143 = vmatpush2.bf16.msra.mxu0 0
    %1144 = vmatprep.subr.bf16.mxu0 0
    %1145 = vmatpush2.bf16.msra.mxu0 0
    %1146 = vmatprep.subr.bf16.mxu0 0
    %1147 = vmatpush2.bf16.msra.mxu0 0
    %1148 = vmatprep.subr.bf16.mxu0 0
    %1149 = vmatpush2.bf16.msra.mxu0 0
    %1150 = vmatprep.subr.bf16.mxu0 0
    %1151 = vmatpush2.bf16.msra.mxu0 0
    %1152 = vmatprep.mubr.bf16.mxu0 0
    %1153 = vmatmul.mubr.bf16.gmra.mxu0 %v816
    %v1154 = vpop.f32.mrf.mxu0
    %v1155 = vadd.f32 %v302, %v1154
    %v1156 = vpop.f32.mrf.mxu0
    %v1157 = vpop.f32.mrf.mxu0
    %v1158 = vadd.f32 %v302, %v1157
    %v1159 = vpop.f32.mrf.mxu0
    %1160 = vmatprep.mubr.bf16.mxu0 0
    %1161 = vmatmul.mubr.bf16.gmra.mxu0 %v817
    %v1162 = vpop.f32.mrf.mxu0
    %v1163 = vadd.f32 %v302, %v1162
    %v1164 = vpop.f32.mrf.mxu0
    %v1165 = vpop.f32.mrf.mxu0
    %v1166 = vadd.f32 %v302, %v1165
    %v1167 = vpop.f32.mrf.mxu0
    %1168 = vmatprep.mubr.bf16.mxu0 0
    %1169 = vmatmul.mubr.bf16.gmra.mxu0 %v818
    %v1170 = vpop.f32.mrf.mxu0
    %v1171 = vadd.f32 %v302, %v1170
    %v1172 = vpop.f32.mrf.mxu0
    %v1173 = vpop.f32.mrf.mxu0
    %v1174 = vadd.f32 %v302, %v1173
    %v1175 = vpop.f32.mrf.mxu0
    %1176 = vmatprep.mubr.bf16.mxu0 0
    %1177 = vmatmul.mubr.bf16.gmra.mxu0 %v819
    %v1178 = vpop.f32.mrf.mxu0
    %v1179 = vadd.f32 %v302, %v1178
    %v1180 = vpop.f32.mrf.mxu0
    %v1181 = vpop.f32.mrf.mxu0
    %v1182 = vadd.f32 %v302, %v1181
    %v1183 = vpop.f32.mrf.mxu0
    %1184 = vmatprep.mubr.bf16.mxu0 0
    %1185 = vmatmul.mubr.bf16.gmra.mxu0 %v820
    %v1186 = vpop.f32.mrf.mxu0
    %v1187 = vadd.f32 %v302, %v1186
    %v1188 = vpop.f32.mrf.mxu0
    %v1189 = vpop.f32.mrf.mxu0
    %v1190 = vadd.f32 %v302, %v1189
    %v1191 = vpop.f32.mrf.mxu0
    %1192 = vmatprep.mubr.bf16.mxu0 0
    %1193 = vmatmul.mubr.bf16.gmra.mxu0 %v821
    %v1194 = vpop.f32.mrf.mxu0
    %v1195 = vadd.f32 %v302, %v1194
    %v1196 = vpop.f32.mrf.mxu0
    %v1197 = vpop.f32.mrf.mxu0
    %v1198 = vadd.f32 %v302, %v1197
    %v1199 = vpop.f32.mrf.mxu0
    %1200 = vmatprep.mubr.bf16.mxu0 0
    %1201 = vmatmul.mubr.bf16.gmra.mxu0 %v822
    %v1202 = vpop.f32.mrf.mxu0
    %v1203 = vadd.f32 %v302, %v1202
    %v1204 = vpop.f32.mrf.mxu0
    %v1205 = vpop.f32.mrf.mxu0
    %v1206 = vadd.f32 %v302, %v1205
    %v1207 = vpop.f32.mrf.mxu0
    %1208 = vmatprep.mubr.bf16.mxu0 0
    %1209 = vmatmul.mubr.bf16.gmra.mxu0 %v823
    %v1210 = vpop.f32.mrf.mxu0
    %v1211 = vadd.f32 %v302, %v1210
    %v1212 = vpop.f32.mrf.mxu0
    %v1213 = vpop.f32.mrf.mxu0
    %v1214 = vadd.f32 %v302, %v1213
    %v1215 = vpop.f32.mrf.mxu0
    %1216 = vmatprep.mubr.bf16.mxu0 0
    %1217 = vmatmul.mubr.bf16.gmra.mxu0 %v824
    %v1218 = vpop.f32.mrf.mxu0
    %v1219 = vadd.f32 %v302, %v1218
    %v1220 = vpop.f32.mrf.mxu0
    %v1221 = vpop.f32.mrf.mxu0
    %v1222 = vadd.f32 %v302, %v1221
    %v1223 = vpop.f32.mrf.mxu0
    %1224 = vmatprep.mubr.bf16.mxu0 0
    %1225 = vmatmul.mubr.bf16.gmra.mxu0 %v825
    %v1226 = vpop.f32.mrf.mxu0
    %v1227 = vadd.f32 %v302, %v1226
    %v1228 = vpop.f32.mrf.mxu0
    %v1229 = vpop.f32.mrf.mxu0
    %v1230 = vadd.f32 %v302, %v1229
    %v1231 = vpop.f32.mrf.mxu0
    %1232 = vmatprep.mubr.bf16.mxu0 0
    %1233 = vmatmul.mubr.bf16.gmra.mxu0 %v826
    %v1234 = vpop.f32.mrf.mxu0
    %v1235 = vadd.f32 %v302, %v1234
    %v1236 = vpop.f32.mrf.mxu0
    %v1237 = vpop.f32.mrf.mxu0
    %v1238 = vadd.f32 %v302, %v1237
    %v1239 = vpop.f32.mrf.mxu0
    %1240 = vmatprep.mubr.bf16.mxu0 0
    %1241 = vmatmul.mubr.bf16.gmra.mxu0 %v827
    %v1242 = vpop.f32.mrf.mxu0
    %v1243 = vadd.f32 %v302, %v1242
    %v1244 = vpop.f32.mrf.mxu0
    %v1245 = vpop.f32.mrf.mxu0
    %v1246 = vadd.f32 %v302, %v1245
    %v1247 = vpop.f32.mrf.mxu0
    %1248 = vmatprep.mubr.bf16.mxu0 0
    %1249 = vmatmul.mubr.bf16.gmra.mxu0 %v828
    %v1250 = vpop.f32.mrf.mxu0
    %v1251 = vadd.f32 %v302, %v1250
    %v1252 = vpop.f32.mrf.mxu0
    %v1253 = vpop.f32.mrf.mxu0
    %v1254 = vadd.f32 %v302, %v1253
    %v1255 = vpop.f32.mrf.mxu0
    %1256 = vmatprep.mubr.bf16.mxu0 0
    %1257 = vmatmul.mubr.bf16.gmra.mxu0 %v829
    %v1258 = vpop.f32.mrf.mxu0
    %v1259 = vadd.f32 %v302, %v1258
    %v1260 = vpop.f32.mrf.mxu0
    %v1261 = vpop.f32.mrf.mxu0
    %v1262 = vadd.f32 %v302, %v1261
    %v1263 = vpop.f32.mrf.mxu0
    %1264 = vmatprep.mubr.bf16.mxu0 0
    %1265 = vmatmul.mubr.bf16.gmra.mxu0 %v830
    %v1266 = vpop.f32.mrf.mxu0
    %v1267 = vadd.f32 %v302, %v1266
    %v1268 = vpop.f32.mrf.mxu0
    %v1269 = vpop.f32.mrf.mxu0
    %v1270 = vadd.f32 %v302, %v1269
    %v1271 = vpop.f32.mrf.mxu0
    %1272 = vmatprep.mubr.bf16.mxu0 0
    %1273 = vmatmul.mubr.bf16.gmra.mxu0 %v831
    %v1274 = vpop.f32.mrf.mxu0
    %v1275 = vadd.f32 %v302, %v1274
    %v1276 = vpop.f32.mrf.mxu0
    %v1277 = vpop.f32.mrf.mxu0
    %v1278 = vadd.f32 %v302, %v1277
    %v1279 = vpop.f32.mrf.mxu0
    %1280 = vmatprep.mubr.bf16.mxu0 0
    %1281 = vmatmul.mubr.bf16.gmra.mxu0 %v832
    %v1282 = vpop.f32.mrf.mxu0
    %v1283 = vadd.f32 %v302, %v1282
    %v1284 = vpop.f32.mrf.mxu0
    %v1285 = vpop.f32.mrf.mxu0
    %v1286 = vadd.f32 %v302, %v1285
    %v1287 = vpop.f32.mrf.mxu0
    %1288 = vmatprep.mubr.bf16.mxu0 0
    %1289 = vmatmul.mubr.bf16.gmra.mxu0 %v833
    %v1290 = vpop.f32.mrf.mxu0
    %v1291 = vadd.f32 %v302, %v1290
    %v1292 = vpop.f32.mrf.mxu0
    %v1293 = vpop.f32.mrf.mxu0
    %v1294 = vadd.f32 %v302, %v1293
    %v1295 = vpop.f32.mrf.mxu0
    %1296 = vmatprep.mubr.bf16.mxu0 0
    %1297 = vmatmul.mubr.bf16.gmra.mxu0 %v834
    %v1298 = vpop.f32.mrf.mxu0
    %v1299 = vadd.f32 %v302, %v1298
    %v1300 = vpop.f32.mrf.mxu0
    %v1301 = vpop.f32.mrf.mxu0
    %v1302 = vadd.f32 %v302, %v1301
    %v1303 = vpop.f32.mrf.mxu0
    %1304 = vmatprep.mubr.bf16.mxu0 0
    %1305 = vmatmul.mubr.bf16.gmra.mxu0 %v835
    %v1306 = vpop.f32.mrf.mxu0
    %v1307 = vadd.f32 %v302, %v1306
    %v1308 = vpop.f32.mrf.mxu0
    %v1309 = vpop.f32.mrf.mxu0
    %v1310 = vadd.f32 %v302, %v1309
    %v1311 = vpop.f32.mrf.mxu0
    %1312 = vmatprep.mubr.bf16.mxu0 0
    %1313 = vmatmul.mubr.bf16.gmra.mxu0 %v836
    %v1314 = vpop.f32.mrf.mxu0
    %v1315 = vadd.f32 %v302, %v1314
    %v1316 = vpop.f32.mrf.mxu0
    %v1317 = vpop.f32.mrf.mxu0
    %v1318 = vadd.f32 %v302, %v1317
    %v1319 = vpop.f32.mrf.mxu0
    %1320 = vmatprep.mubr.bf16.mxu0 0
    %1321 = vmatmul.mubr.bf16.gmra.mxu0 %v837
    %v1322 = vpop.f32.mrf.mxu0
    %v1323 = vadd.f32 %v302, %v1322
    %v1324 = vpop.f32.mrf.mxu0
    %v1325 = vpop.f32.mrf.mxu0
    %v1326 = vadd.f32 %v302, %v1325
    %v1327 = vpop.f32.mrf.mxu0
    %1328 = vmatprep.mubr.bf16.mxu0 0
    %1329 = vmatmul.mubr.bf16.gmra.mxu0 %v838
    %v1330 = vpop.f32.mrf.mxu0
    %v1331 = vadd.f32 %v302, %v1330
    %v1332 = vpop.f32.mrf.mxu0
    %v1333 = vpop.f32.mrf.mxu0
    %v1334 = vadd.f32 %v302, %v1333
    %v1335 = vpop.f32.mrf.mxu0
    %1336 = vmatprep.mubr.bf16.mxu0 0
    %1337 = vmatmul.mubr.bf16.gmra.mxu0 %v839
    %v1338 = vpop.f32.mrf.mxu0
    %v1339 = vadd.f32 %v302, %v1338
    %v1340 = vpop.f32.mrf.mxu0
    %v1341 = vpop.f32.mrf.mxu0
    %v1342 = vadd.f32 %v302, %v1341
    %v1343 = vpop.f32.mrf.mxu0
    %1344 = vmatprep.mubr.bf16.mxu0 0
    %1345 = vmatmul.mubr.bf16.gmra.mxu0 %v840
    %v1346 = vpop.f32.mrf.mxu0
    %v1347 = vadd.f32 %v302, %v1346
    %v1348 = vpop.f32.mrf.mxu0
    %v1349 = vpop.f32.mrf.mxu0
    %v1350 = vadd.f32 %v302, %v1349
    %v1351 = vpop.f32.mrf.mxu0
    %1352 = vmatprep.mubr.bf16.mxu0 0
    %1353 = vmatmul.mubr.bf16.gmra.mxu0 %v841
    %v1354 = vpop.f32.mrf.mxu0
    %v1355 = vadd.f32 %v302, %v1354
    %v1356 = vpop.f32.mrf.mxu0
    %v1357 = vpop.f32.mrf.mxu0
    %v1358 = vadd.f32 %v302, %v1357
    %v1359 = vpop.f32.mrf.mxu0
    %1360 = vmatprep.mubr.bf16.mxu0 0
    %1361 = vmatmul.mubr.bf16.gmra.mxu0 %v842
    %v1362 = vpop.f32.mrf.mxu0
    %v1363 = vadd.f32 %v302, %v1362
    %v1364 = vpop.f32.mrf.mxu0
    %v1365 = vpop.f32.mrf.mxu0
    %v1366 = vadd.f32 %v302, %v1365
    %v1367 = vpop.f32.mrf.mxu0
    %1368 = vmatprep.mubr.bf16.mxu0 0
    %1369 = vmatmul.mubr.bf16.gmra.mxu0 %v843
    %v1370 = vpop.f32.mrf.mxu0
    %v1371 = vadd.f32 %v302, %v1370
    %v1372 = vpop.f32.mrf.mxu0
    %v1373 = vpop.f32.mrf.mxu0
    %v1374 = vadd.f32 %v302, %v1373
    %v1375 = vpop.f32.mrf.mxu0
    %1376 = vmatprep.mubr.bf16.mxu0 0
    %1377 = vmatmul.mubr.bf16.gmra.mxu0 %v844
    %v1378 = vpop.f32.mrf.mxu0
    %v1379 = vadd.f32 %v302, %v1378
    %v1380 = vpop.f32.mrf.mxu0
    %v1381 = vpop.f32.mrf.mxu0
    %v1382 = vadd.f32 %v302, %v1381
    %v1383 = vpop.f32.mrf.mxu0
    %1384 = vmatprep.mubr.bf16.mxu0 0
    %1385 = vmatmul.mubr.bf16.gmra.mxu0 %v845
    %v1386 = vpop.f32.mrf.mxu0
    %v1387 = vadd.f32 %v302, %v1386
    %v1388 = vpop.f32.mrf.mxu0
    %v1389 = vpop.f32.mrf.mxu0
    %v1390 = vadd.f32 %v302, %v1389
    %v1391 = vpop.f32.mrf.mxu0
    %1392 = vmatprep.mubr.bf16.mxu0 0
    %1393 = vmatmul.mubr.bf16.gmra.mxu0 %v846
    %v1394 = vpop.f32.mrf.mxu0
    %v1395 = vadd.f32 %v302, %v1394
    %v1396 = vpop.f32.mrf.mxu0
    %v1397 = vpop.f32.mrf.mxu0
    %v1398 = vadd.f32 %v302, %v1397
    %v1399 = vpop.f32.mrf.mxu0
    %1400 = vmatprep.mubr.bf16.mxu0 0
    %1401 = vmatmul.mubr.bf16.gmra.mxu0 %v847
    %v1402 = vpop.f32.mrf.mxu0
    %v1403 = vadd.f32 %v302, %v1402
    %v1404 = vpop.f32.mrf.mxu0
    %v1405 = vpop.f32.mrf.mxu0
    %v1406 = vadd.f32 %v302, %v1405
    %v1407 = vpop.f32.mrf.mxu0
    %1408 = vmatprep.mubr.bf16.mxu0 0
    %1409 = vmatmul.mubr.bf16.gmra.mxu0 %v848
    %v1410 = vpop.f32.mrf.mxu0
    %v1411 = vadd.f32 %v302, %v1410
    %v1412 = vpop.f32.mrf.mxu0
    %v1413 = vpop.f32.mrf.mxu0
    %v1414 = vadd.f32 %v302, %v1413
    %v1415 = vpop.f32.mrf.mxu0
    %1416 = vmatprep.mubr.bf16.mxu0 0
    %1417 = vmatmul.mubr.bf16.gmra.mxu0 %v849
    %v1418 = vpop.f32.mrf.mxu0
    %v1419 = vadd.f32 %v302, %v1418
    %v1420 = vpop.f32.mrf.mxu0
    %v1421 = vpop.f32.mrf.mxu0
    %v1422 = vadd.f32 %v302, %v1421
    %v1423 = vpop.f32.mrf.mxu0
    %1424 = vmatprep.mubr.bf16.mxu0 0
    %1425 = vmatmul.mubr.bf16.gmra.mxu0 %v850
    %v1426 = vpop.f32.mrf.mxu0
    %v1427 = vadd.f32 %v302, %v1426
    %v1428 = vpop.f32.mrf.mxu0
    %v1429 = vpop.f32.mrf.mxu0
    %v1430 = vadd.f32 %v302, %v1429
    %v1431 = vpop.f32.mrf.mxu0
    %1432 = vmatprep.mubr.bf16.mxu0 0
    %1433 = vmatmul.mubr.bf16.gmra.mxu0 %v851
    %v1434 = vpop.f32.mrf.mxu0
    %v1435 = vadd.f32 %v302, %v1434
    %v1436 = vpop.f32.mrf.mxu0
    %v1437 = vpop.f32.mrf.mxu0
    %v1438 = vadd.f32 %v302, %v1437
    %v1439 = vpop.f32.mrf.mxu0
    %1440 = vmatprep.mubr.bf16.mxu0 0
    %1441 = vmatmul.mubr.bf16.gmra.mxu0 %v852
    %v1442 = vpop.f32.mrf.mxu0
    %v1443 = vadd.f32 %v302, %v1442
    %v1444 = vpop.f32.mrf.mxu0
    %v1445 = vpop.f32.mrf.mxu0
    %v1446 = vadd.f32 %v302, %v1445
    %v1447 = vpop.f32.mrf.mxu0
    %1448 = vmatprep.mubr.bf16.mxu0 0
    %1449 = vmatmul.mubr.bf16.gmra.mxu0 %v853
    %v1450 = vpop.f32.mrf.mxu0
    %v1451 = vadd.f32 %v302, %v1450
    %v1452 = vpop.f32.mrf.mxu0
    %v1453 = vpop.f32.mrf.mxu0
    %v1454 = vadd.f32 %v302, %v1453
    %v1455 = vpop.f32.mrf.mxu0
    %1456 = vmatprep.mubr.bf16.mxu0 0
    %1457 = vmatmul.mubr.bf16.gmra.mxu0 %v854
    %v1458 = vpop.f32.mrf.mxu0
    %v1459 = vadd.f32 %v302, %v1458
    %v1460 = vpop.f32.mrf.mxu0
    %v1461 = vpop.f32.mrf.mxu0
    %v1462 = vadd.f32 %v302, %v1461
    %v1463 = vpop.f32.mrf.mxu0
    %1464 = vmatprep.mubr.bf16.mxu0 0
    %1465 = vmatmul.mubr.bf16.gmra.mxu0 %v855
    %v1466 = vpop.f32.mrf.mxu0
    %v1467 = vadd.f32 %v302, %v1466
    %v1468 = vpop.f32.mrf.mxu0
    %v1469 = vpop.f32.mrf.mxu0
    %v1470 = vadd.f32 %v302, %v1469
    %v1471 = vpop.f32.mrf.mxu0
    %1472 = vmatprep.mubr.bf16.mxu0 0
    %1473 = vmatmul.mubr.bf16.gmra.mxu0 %v856
    %v1474 = vpop.f32.mrf.mxu0
    %v1475 = vadd.f32 %v302, %v1474
    %v1476 = vpop.f32.mrf.mxu0
    %v1477 = vpop.f32.mrf.mxu0
    %v1478 = vadd.f32 %v302, %v1477
    %v1479 = vpop.f32.mrf.mxu0
    %1480 = vmatprep.mubr.bf16.mxu0 0
    %1481 = vmatmul.mubr.bf16.gmra.mxu0 %v857
    %v1482 = vpop.f32.mrf.mxu0
    %v1483 = vadd.f32 %v302, %v1482
    %v1484 = vpop.f32.mrf.mxu0
    %v1485 = vpop.f32.mrf.mxu0
    %v1486 = vadd.f32 %v302, %v1485
    %v1487 = vpop.f32.mrf.mxu0
    %1488 = vmatprep.mubr.bf16.mxu0 0
    %1489 = vmatmul.mubr.bf16.gmra.mxu0 %v858
    %v1490 = vpop.f32.mrf.mxu0
    %v1491 = vadd.f32 %v302, %v1490
    %v1492 = vpop.f32.mrf.mxu0
    %v1493 = vpop.f32.mrf.mxu0
    %v1494 = vadd.f32 %v302, %v1493
    %v1495 = vpop.f32.mrf.mxu0
    %1496 = vmatprep.mubr.bf16.mxu0 0
    %1497 = vmatmul.mubr.bf16.gmra.mxu0 %v859
    %v1498 = vpop.f32.mrf.mxu0
    %v1499 = vadd.f32 %v302, %v1498
    %v1500 = vpop.f32.mrf.mxu0
    %v1501 = vpop.f32.mrf.mxu0
    %v1502 = vadd.f32 %v302, %v1501
    %v1503 = vpop.f32.mrf.mxu0
    %1504 = vmatprep.mubr.bf16.mxu0 0
    %1505 = vmatmul.mubr.bf16.gmra.mxu0 %v860
    %v1506 = vpop.f32.mrf.mxu0
    %v1507 = vadd.f32 %v302, %v1506
    %v1508 = vpop.f32.mrf.mxu0
    %v1509 = vpop.f32.mrf.mxu0
    %v1510 = vadd.f32 %v302, %v1509
    %v1511 = vpop.f32.mrf.mxu0
    %1512 = vmatprep.mubr.bf16.mxu0 0
    %1513 = vmatmul.mubr.bf16.gmra.mxu0 %v861
    %v1514 = vpop.f32.mrf.mxu0
    %v1515 = vadd.f32 %v302, %v1514
    %v1516 = vpop.f32.mrf.mxu0
    %v1517 = vpop.f32.mrf.mxu0
    %v1518 = vadd.f32 %v302, %v1517
    %v1519 = vpop.f32.mrf.mxu0
    %1520 = vmatprep.mubr.bf16.mxu0 0
    %1521 = vmatmul.mubr.bf16.gmra.mxu0 %v862
    %v1522 = vpop.f32.mrf.mxu0
    %v1523 = vadd.f32 %v302, %v1522
    %v1524 = vpop.f32.mrf.mxu0
    %v1525 = vpop.f32.mrf.mxu0
    %v1526 = vadd.f32 %v302, %v1525
    %v1527 = vpop.f32.mrf.mxu0
    %1528 = vmatprep.mubr.bf16.mxu0 0
    %1529 = vmatmul.mubr.bf16.gmra.mxu0 %v863
    %v1530 = vpop.f32.mrf.mxu0
    %v1531 = vadd.f32 %v302, %v1530
    %v1532 = vpop.f32.mrf.mxu0
    %v1533 = vpop.f32.mrf.mxu0
    %v1534 = vadd.f32 %v302, %v1533
    %v1535 = vpop.f32.mrf.mxu0
    %1536 = vmatprep.mubr.bf16.mxu0 0
    %1537 = vmatmul.mubr.bf16.gmra.mxu0 %v864
    %v1538 = vpop.f32.mrf.mxu0
    %v1539 = vadd.f32 %v302, %v1538
    %v1540 = vpop.f32.mrf.mxu0
    %v1541 = vpop.f32.mrf.mxu0
    %v1542 = vadd.f32 %v302, %v1541
    %v1543 = vpop.f32.mrf.mxu0
    %1544 = vmatprep.mubr.bf16.mxu0 0
    %1545 = vmatmul.mubr.bf16.gmra.mxu0 %v865
    %v1546 = vpop.f32.mrf.mxu0
    %v1547 = vadd.f32 %v302, %v1546
    %v1548 = vpop.f32.mrf.mxu0
    %v1549 = vpop.f32.mrf.mxu0
    %v1550 = vadd.f32 %v302, %v1549
    %v1551 = vpop.f32.mrf.mxu0
    %1552 = vmatprep.mubr.bf16.mxu0 0
    %1553 = vmatmul.mubr.bf16.gmra.mxu0 %v866
    %v1554 = vpop.f32.mrf.mxu0
    %v1555 = vadd.f32 %v302, %v1554
    %v1556 = vpop.f32.mrf.mxu0
    %v1557 = vpop.f32.mrf.mxu0
    %v1558 = vadd.f32 %v302, %v1557
    %v1559 = vpop.f32.mrf.mxu0
    %1560 = vmatprep.mubr.bf16.mxu0 0
    %1561 = vmatmul.mubr.bf16.gmra.mxu0 %v867
    %v1562 = vpop.f32.mrf.mxu0
    %v1563 = vadd.f32 %v302, %v1562
    %v1564 = vpop.f32.mrf.mxu0
    %v1565 = vpop.f32.mrf.mxu0
    %v1566 = vadd.f32 %v302, %v1565
    %v1567 = vpop.f32.mrf.mxu0
    %1568 = vmatprep.mubr.bf16.mxu0 0
    %1569 = vmatmul.mubr.bf16.gmra.mxu0 %v868
    %v1570 = vpop.f32.mrf.mxu0
    %v1571 = vadd.f32 %v302, %v1570
    %v1572 = vpop.f32.mrf.mxu0
    %v1573 = vpop.f32.mrf.mxu0
    %v1574 = vadd.f32 %v302, %v1573
    %v1575 = vpop.f32.mrf.mxu0
    %1576 = vmatprep.mubr.bf16.mxu0 0
    %1577 = vmatmul.mubr.bf16.gmra.mxu0 %v869
    %v1578 = vpop.f32.mrf.mxu0
    %v1579 = vadd.f32 %v302, %v1578
    %v1580 = vpop.f32.mrf.mxu0
    %v1581 = vpop.f32.mrf.mxu0
    %v1582 = vadd.f32 %v302, %v1581
    %v1583 = vpop.f32.mrf.mxu0
    %1584 = vmatprep.mubr.bf16.mxu0 0
    %1585 = vmatmul.mubr.bf16.gmra.mxu0 %v870
    %v1586 = vpop.f32.mrf.mxu0
    %v1587 = vadd.f32 %v302, %v1586
    %v1588 = vpop.f32.mrf.mxu0
    %v1589 = vpop.f32.mrf.mxu0
    %v1590 = vadd.f32 %v302, %v1589
    %v1591 = vpop.f32.mrf.mxu0
    %1592 = vmatprep.mubr.bf16.mxu0 0
    %1593 = vmatmul.mubr.bf16.gmra.mxu0 %v871
    %v1594 = vpop.f32.mrf.mxu0
    %v1595 = vadd.f32 %v302, %v1594
    %v1596 = vpop.f32.mrf.mxu0
    %v1597 = vpop.f32.mrf.mxu0
    %v1598 = vadd.f32 %v302, %v1597
    %v1599 = vpop.f32.mrf.mxu0
    %1600 = vmatprep.mubr.bf16.mxu0 0
    %1601 = vmatmul.mubr.bf16.gmra.mxu0 %v872
    %v1602 = vpop.f32.mrf.mxu0
    %v1603 = vadd.f32 %v302, %v1602
    %v1604 = vpop.f32.mrf.mxu0
    %v1605 = vpop.f32.mrf.mxu0
    %v1606 = vadd.f32 %v302, %v1605
    %v1607 = vpop.f32.mrf.mxu0
    %1608 = vmatprep.mubr.bf16.mxu0 0
    %1609 = vmatmul.mubr.bf16.gmra.mxu0 %v873
    %v1610 = vpop.f32.mrf.mxu0
    %v1611 = vadd.f32 %v302, %v1610
    %v1612 = vpop.f32.mrf.mxu0
    %v1613 = vpop.f32.mrf.mxu0
    %v1614 = vadd.f32 %v302, %v1613
    %v1615 = vpop.f32.mrf.mxu0
    %1616 = vmatprep.mubr.bf16.mxu0 0
    %1617 = vmatmul.mubr.bf16.gmra.mxu0 %v874
    %v1618 = vpop.f32.mrf.mxu0
    %v1619 = vadd.f32 %v302, %v1618
    %v1620 = vpop.f32.mrf.mxu0
    %v1621 = vpop.f32.mrf.mxu0
    %v1622 = vadd.f32 %v302, %v1621
    %v1623 = vpop.f32.mrf.mxu0
    %1624 = vmatprep.mubr.bf16.mxu0 0
    %1625 = vmatmul.mubr.bf16.gmra.mxu0 %v875
    %v1626 = vpop.f32.mrf.mxu0
    %v1627 = vadd.f32 %v302, %v1626
    %v1628 = vpop.f32.mrf.mxu0
    %v1629 = vpop.f32.mrf.mxu0
    %v1630 = vadd.f32 %v302, %v1629
    %v1631 = vpop.f32.mrf.mxu0
    %1632 = vmatprep.mubr.bf16.mxu0 0
    %1633 = vmatmul.mubr.bf16.gmra.mxu0 %v876
    %v1634 = vpop.f32.mrf.mxu0
    %v1635 = vadd.f32 %v302, %v1634
    %v1636 = vpop.f32.mrf.mxu0
    %v1637 = vpop.f32.mrf.mxu0
    %v1638 = vadd.f32 %v302, %v1637
    %v1639 = vpop.f32.mrf.mxu0
    %1640 = vmatprep.mubr.bf16.mxu0 0
    %1641 = vmatmul.mubr.bf16.gmra.mxu0 %v877
    %v1642 = vpop.f32.mrf.mxu0
    %v1643 = vadd.f32 %v302, %v1642
    %v1644 = vpop.f32.mrf.mxu0
    %v1645 = vpop.f32.mrf.mxu0
    %v1646 = vadd.f32 %v302, %v1645
    %v1647 = vpop.f32.mrf.mxu0
    %1648 = vmatprep.mubr.bf16.mxu0 0
    %1649 = vmatmul.mubr.bf16.gmra.mxu0 %v878
    %v1650 = vpop.f32.mrf.mxu0
    %v1651 = vadd.f32 %v302, %v1650
    %v1652 = vpop.f32.mrf.mxu0
    %v1653 = vpop.f32.mrf.mxu0
    %v1654 = vadd.f32 %v302, %v1653
    %v1655 = vpop.f32.mrf.mxu0
    %1656 = vmatprep.mubr.bf16.mxu0 0
    %1657 = vmatmul.mubr.bf16.gmra.mxu0 %v879
    %v1658 = vpop.f32.mrf.mxu0
    %v1659 = vadd.f32 %v302, %v1658
    %v1660 = vpop.f32.mrf.mxu0
    %v1661 = vpop.f32.mrf.mxu0
    %v1662 = vadd.f32 %v302, %v1661
    %v1663 = vpop.f32.mrf.mxu0
    %1664 = vmatprep.mubr.bf16.mxu0 0
    %1665 = vmatmul.mubr.bf16.gmra.mxu0 %v880
    %v1666 = vpop.f32.mrf.mxu0
    %v1667 = vadd.f32 %v302, %v1666
    %v1668 = vpop.f32.mrf.mxu0
    %v1669 = vpop.f32.mrf.mxu0
    %v1670 = vadd.f32 %v302, %v1669
    %v1671 = vpop.f32.mrf.mxu0
    %1672 = vmatprep.mubr.bf16.mxu0 0
    %1673 = vmatmul.mubr.bf16.gmra.mxu0 %v881
    %v1674 = vpop.f32.mrf.mxu0
    %v1675 = vadd.f32 %v302, %v1674
    %v1676 = vpop.f32.mrf.mxu0
    %v1677 = vpop.f32.mrf.mxu0
    %v1678 = vadd.f32 %v302, %v1677
    %v1679 = vpop.f32.mrf.mxu0
    %1680 = vmatprep.mubr.bf16.mxu0 0
    %1681 = vmatmul.mubr.bf16.gmra.mxu0 %v882
    %v1682 = vpop.f32.mrf.mxu0
    %v1683 = vadd.f32 %v302, %v1682
    %v1684 = vpop.f32.mrf.mxu0
    %v1685 = vpop.f32.mrf.mxu0
    %v1686 = vadd.f32 %v302, %v1685
    %v1687 = vpop.f32.mrf.mxu0
    %1688 = vmatprep.mubr.bf16.mxu0 0
    %1689 = vmatmul.mubr.bf16.gmra.mxu0 %v883
    %v1690 = vpop.f32.mrf.mxu0
    %v1691 = vadd.f32 %v302, %v1690
    %v1692 = vpop.f32.mrf.mxu0
    %v1693 = vpop.f32.mrf.mxu0
    %v1694 = vadd.f32 %v302, %v1693
    %v1695 = vpop.f32.mrf.mxu0
    %1696 = vmatprep.mubr.bf16.mxu0 0
    %1697 = vmatmul.mubr.bf16.gmra.mxu0 %v884
    %v1698 = vpop.f32.mrf.mxu0
    %v1699 = vadd.f32 %v302, %v1698
    %v1700 = vpop.f32.mrf.mxu0
    %v1701 = vpop.f32.mrf.mxu0
    %v1702 = vadd.f32 %v302, %v1701
    %v1703 = vpop.f32.mrf.mxu0
    %1704 = vmatprep.mubr.bf16.mxu0 0
    %1705 = vmatmul.mubr.bf16.gmra.mxu0 %v885
    %v1706 = vpop.f32.mrf.mxu0
    %v1707 = vadd.f32 %v302, %v1706
    %v1708 = vpop.f32.mrf.mxu0
    %v1709 = vpop.f32.mrf.mxu0
    %v1710 = vadd.f32 %v302, %v1709
    %v1711 = vpop.f32.mrf.mxu0
    %1712 = vmatprep.mubr.bf16.mxu0 0
    %1713 = vmatmul.mubr.bf16.gmra.mxu0 %v886
    %v1714 = vpop.f32.mrf.mxu0
    %v1715 = vadd.f32 %v302, %v1714
    %v1716 = vpop.f32.mrf.mxu0
    %v1717 = vpop.f32.mrf.mxu0
    %v1718 = vadd.f32 %v302, %v1717
    %v1719 = vpop.f32.mrf.mxu0
    %1720 = vmatprep.mubr.bf16.mxu0 0
    %1721 = vmatmul.mubr.bf16.gmra.mxu0 %v887
    %v1722 = vpop.f32.mrf.mxu0
    %v1723 = vadd.f32 %v302, %v1722
    %v1724 = vpop.f32.mrf.mxu0
    %v1725 = vpop.f32.mrf.mxu0
    %v1726 = vadd.f32 %v302, %v1725
    %v1727 = vpop.f32.mrf.mxu0
    %1728 = vmatprep.mubr.bf16.mxu0 0
    %1729 = vmatmul.mubr.bf16.gmra.mxu0 %v888
    %v1730 = vpop.f32.mrf.mxu0
    %v1731 = vadd.f32 %v302, %v1730
    %v1732 = vpop.f32.mrf.mxu0
    %v1733 = vpop.f32.mrf.mxu0
    %v1734 = vadd.f32 %v302, %v1733
    %v1735 = vpop.f32.mrf.mxu0
    %1736 = vmatprep.mubr.bf16.mxu0 0
    %1737 = vmatmul.mubr.bf16.gmra.mxu0 %v889
    %v1738 = vpop.f32.mrf.mxu0
    %v1739 = vadd.f32 %v302, %v1738
    %v1740 = vpop.f32.mrf.mxu0
    %v1741 = vpop.f32.mrf.mxu0
    %v1742 = vadd.f32 %v302, %v1741
    %v1743 = vpop.f32.mrf.mxu0
    %1744 = vmatprep.mubr.bf16.mxu0 0
    %1745 = vmatmul.mubr.bf16.gmra.mxu0 %v890
    %v1746 = vpop.f32.mrf.mxu0
    %v1747 = vadd.f32 %v302, %v1746
    %v1748 = vpop.f32.mrf.mxu0
    %v1749 = vpop.f32.mrf.mxu0
    %v1750 = vadd.f32 %v302, %v1749
    %v1751 = vpop.f32.mrf.mxu0
    %1752 = vmatprep.mubr.bf16.mxu0 0
    %1753 = vmatmul.mubr.bf16.gmra.mxu0 %v891
    %v1754 = vpop.f32.mrf.mxu0
    %v1755 = vadd.f32 %v302, %v1754
    %v1756 = vpop.f32.mrf.mxu0
    %v1757 = vpop.f32.mrf.mxu0
    %v1758 = vadd.f32 %v302, %v1757
    %v1759 = vpop.f32.mrf.mxu0
    %1760 = vmatprep.mubr.bf16.mxu0 0
    %1761 = vmatmul.mubr.bf16.gmra.mxu0 %v892
    %v1762 = vpop.f32.mrf.mxu0
    %v1763 = vadd.f32 %v302, %v1762
    %v1764 = vpop.f32.mrf.mxu0
    %v1765 = vpop.f32.mrf.mxu0
    %v1766 = vadd.f32 %v302, %v1765
    %v1767 = vpop.f32.mrf.mxu0
    %1768 = vmatprep.mubr.bf16.mxu0 0
    %1769 = vmatmul.mubr.bf16.gmra.mxu0 %v893
    %v1770 = vpop.f32.mrf.mxu0
    %v1771 = vadd.f32 %v302, %v1770
    %v1772 = vpop.f32.mrf.mxu0
    %v1773 = vpop.f32.mrf.mxu0
    %v1774 = vadd.f32 %v302, %v1773
    %v1775 = vpop.f32.mrf.mxu0
    %1776 = vmatprep.mubr.bf16.mxu0 0
    %1777 = vmatmul.mubr.bf16.gmra.mxu0 %v894
    %v1778 = vpop.f32.mrf.mxu0
    %v1779 = vadd.f32 %v302, %v1778
    %v1780 = vpop.f32.mrf.mxu0
    %v1781 = vpop.f32.mrf.mxu0
    %v1782 = vadd.f32 %v302, %v1781
    %v1783 = vpop.f32.mrf.mxu0
    %1784 = vmatprep.mubr.bf16.mxu0 0
    %1785 = vmatmul.mubr.bf16.gmra.mxu0 %v895
    %v1786 = vpop.f32.mrf.mxu0
    %v1787 = vadd.f32 %v302, %v1786
    %v1788 = vpop.f32.mrf.mxu0
    %v1789 = vpop.f32.mrf.mxu0
    %v1790 = vadd.f32 %v302, %v1789
    %v1791 = vpop.f32.mrf.mxu0
    %1792 = vmatprep.mubr.bf16.mxu0 0
    %1793 = vmatmul.mubr.bf16.gmra.mxu0 %v896
    %v1794 = vpop.f32.mrf.mxu0
    %v1795 = vadd.f32 %v302, %v1794
    %v1796 = vpop.f32.mrf.mxu0
    %v1797 = vpop.f32.mrf.mxu0
    %v1798 = vadd.f32 %v302, %v1797
    %v1799 = vpop.f32.mrf.mxu0
    %1800 = vmatprep.mubr.bf16.mxu0 0
    %1801 = vmatmul.mubr.bf16.gmra.mxu0 %v897
    %v1802 = vpop.f32.mrf.mxu0
    %v1803 = vadd.f32 %v302, %v1802
    %v1804 = vpop.f32.mrf.mxu0
    %v1805 = vpop.f32.mrf.mxu0
    %v1806 = vadd.f32 %v302, %v1805
    %v1807 = vpop.f32.mrf.mxu0
    %1808 = vmatprep.mubr.bf16.mxu0 0
    %1809 = vmatmul.mubr.bf16.gmra.mxu0 %v898
    %v1810 = vpop.f32.mrf.mxu0
    %v1811 = vadd.f32 %v302, %v1810
    %v1812 = vpop.f32.mrf.mxu0
    %v1813 = vpop.f32.mrf.mxu0
    %v1814 = vadd.f32 %v302, %v1813
    %v1815 = vpop.f32.mrf.mxu0
    %1816 = vmatprep.mubr.bf16.mxu0 0
    %1817 = vmatmul.mubr.bf16.gmra.mxu0 %v899
    %v1818 = vpop.f32.mrf.mxu0
    %v1819 = vadd.f32 %v302, %v1818
    %v1820 = vpop.f32.mrf.mxu0
    %v1821 = vpop.f32.mrf.mxu0
    %v1822 = vadd.f32 %v302, %v1821
    %v1823 = vpop.f32.mrf.mxu0
    %1824 = vmatprep.mubr.bf16.mxu0 0
    %1825 = vmatmul.mubr.bf16.gmra.mxu0 %v900
    %v1826 = vpop.f32.mrf.mxu0
    %v1827 = vadd.f32 %v302, %v1826
    %v1828 = vpop.f32.mrf.mxu0
    %v1829 = vpop.f32.mrf.mxu0
    %v1830 = vadd.f32 %v302, %v1829
    %v1831 = vpop.f32.mrf.mxu0
    %1832 = vmatprep.mubr.bf16.mxu0 0
    %1833 = vmatmul.mubr.bf16.gmra.mxu0 %v901
    %v1834 = vpop.f32.mrf.mxu0
    %v1835 = vadd.f32 %v302, %v1834
    %v1836 = vpop.f32.mrf.mxu0
    %v1837 = vpop.f32.mrf.mxu0
    %v1838 = vadd.f32 %v302, %v1837
    %v1839 = vpop.f32.mrf.mxu0
    %1840 = vmatprep.mubr.bf16.mxu0 0
    %1841 = vmatmul.mubr.bf16.gmra.mxu0 %v902
    %v1842 = vpop.f32.mrf.mxu0
    %v1843 = vadd.f32 %v302, %v1842
    %v1844 = vpop.f32.mrf.mxu0
    %v1845 = vpop.f32.mrf.mxu0
    %v1846 = vadd.f32 %v302, %v1845
    %v1847 = vpop.f32.mrf.mxu0
    %1848 = vmatprep.mubr.bf16.mxu0 0
    %1849 = vmatmul.mubr.bf16.gmra.mxu0 %v903
    %v1850 = vpop.f32.mrf.mxu0
    %v1851 = vadd.f32 %v302, %v1850
    %v1852 = vpop.f32.mrf.mxu0
    %v1853 = vpop.f32.mrf.mxu0
    %v1854 = vadd.f32 %v302, %v1853
    %v1855 = vpop.f32.mrf.mxu0
    %1856 = vmatprep.mubr.bf16.mxu0 0
    %1857 = vmatmul.mubr.bf16.gmra.mxu0 %v904
    %v1858 = vpop.f32.mrf.mxu0
    %v1859 = vadd.f32 %v302, %v1858
    %v1860 = vpop.f32.mrf.mxu0
    %v1861 = vpop.f32.mrf.mxu0
    %v1862 = vadd.f32 %v302, %v1861
    %v1863 = vpop.f32.mrf.mxu0
    %1864 = vmatprep.mubr.bf16.mxu0 0
    %1865 = vmatmul.mubr.bf16.gmra.mxu0 %v905
    %v1866 = vpop.f32.mrf.mxu0
    %v1867 = vadd.f32 %v302, %v1866
    %v1868 = vpop.f32.mrf.mxu0
    %v1869 = vpop.f32.mrf.mxu0
    %v1870 = vadd.f32 %v302, %v1869
    %v1871 = vpop.f32.mrf.mxu0
    %1872 = vmatprep.mubr.bf16.mxu0 0
    %1873 = vmatmul.mubr.bf16.gmra.mxu0 %v906
    %v1874 = vpop.f32.mrf.mxu0
    %v1875 = vadd.f32 %v302, %v1874
    %v1876 = vpop.f32.mrf.mxu0
    %v1877 = vpop.f32.mrf.mxu0
    %v1878 = vadd.f32 %v302, %v1877
    %v1879 = vpop.f32.mrf.mxu0
    %1880 = vmatprep.mubr.bf16.mxu0 0
    %1881 = vmatmul.mubr.bf16.gmra.mxu0 %v907
    %v1882 = vpop.f32.mrf.mxu0
    %v1883 = vadd.f32 %v302, %v1882
    %v1884 = vpop.f32.mrf.mxu0
    %v1885 = vpop.f32.mrf.mxu0
    %v1886 = vadd.f32 %v302, %v1885
    %v1887 = vpop.f32.mrf.mxu0
    %1888 = vmatprep.mubr.bf16.mxu0 0
    %1889 = vmatmul.mubr.bf16.gmra.mxu0 %v908
    %v1890 = vpop.f32.mrf.mxu0
    %v1891 = vadd.f32 %v302, %v1890
    %v1892 = vpop.f32.mrf.mxu0
    %v1893 = vpop.f32.mrf.mxu0
    %v1894 = vadd.f32 %v302, %v1893
    %v1895 = vpop.f32.mrf.mxu0
    %1896 = vmatprep.mubr.bf16.mxu0 0
    %1897 = vmatmul.mubr.bf16.gmra.mxu0 %v909
    %v1898 = vpop.f32.mrf.mxu0
    %v1899 = vadd.f32 %v302, %v1898
    %v1900 = vpop.f32.mrf.mxu0
    %v1901 = vpop.f32.mrf.mxu0
    %v1902 = vadd.f32 %v302, %v1901
    %v1903 = vpop.f32.mrf.mxu0
    %1904 = vmatprep.mubr.bf16.mxu0 0
    %1905 = vmatmul.mubr.bf16.gmra.mxu0 %v910
    %v1906 = vpop.f32.mrf.mxu0
    %v1907 = vadd.f32 %v302, %v1906
    %v1908 = vpop.f32.mrf.mxu0
    %v1909 = vpop.f32.mrf.mxu0
    %v1910 = vadd.f32 %v302, %v1909
    %v1911 = vpop.f32.mrf.mxu0
    %1912 = vmatprep.mubr.bf16.mxu0 0
    %1913 = vmatmul.mubr.bf16.gmra.mxu0 %v911
    %v1914 = vpop.f32.mrf.mxu0
    %v1915 = vadd.f32 %v302, %v1914
    %v1916 = vpop.f32.mrf.mxu0
    %v1917 = vpop.f32.mrf.mxu0
    %v1918 = vadd.f32 %v302, %v1917
    %v1919 = vpop.f32.mrf.mxu0
    %1920 = vmatprep.mubr.bf16.mxu0 0
    %1921 = vmatmul.mubr.bf16.gmra.mxu0 %v912
    %v1922 = vpop.f32.mrf.mxu0
    %v1923 = vadd.f32 %v302, %v1922
    %v1924 = vpop.f32.mrf.mxu0
    %v1925 = vpop.f32.mrf.mxu0
    %v1926 = vadd.f32 %v302, %v1925
    %v1927 = vpop.f32.mrf.mxu0
    %1928 = vmatprep.mubr.bf16.mxu0 0
    %1929 = vmatmul.mubr.bf16.gmra.mxu0 %v913
    %v1930 = vpop.f32.mrf.mxu0
    %v1931 = vadd.f32 %v302, %v1930
    %v1932 = vpop.f32.mrf.mxu0
    %v1933 = vpop.f32.mrf.mxu0
    %v1934 = vadd.f32 %v302, %v1933
    %v1935 = vpop.f32.mrf.mxu0
    %1936 = vmatprep.mubr.bf16.mxu0 0
    %1937 = vmatmul.mubr.bf16.gmra.mxu0 %v914
    %v1938 = vpop.f32.mrf.mxu0
    %v1939 = vadd.f32 %v302, %v1938
    %v1940 = vpop.f32.mrf.mxu0
    %v1941 = vpop.f32.mrf.mxu0
    %v1942 = vadd.f32 %v302, %v1941
    %v1943 = vpop.f32.mrf.mxu0
    %1944 = vmatprep.mubr.bf16.mxu0 0
    %1945 = vmatmul.mubr.bf16.gmra.mxu0 %v915
    %v1946 = vpop.f32.mrf.mxu0
    %v1947 = vadd.f32 %v302, %v1946
    %v1948 = vpop.f32.mrf.mxu0
    %v1949 = vpop.f32.mrf.mxu0
    %v1950 = vadd.f32 %v302, %v1949
    %v1951 = vpop.f32.mrf.mxu0
    %1952 = vmatprep.mubr.bf16.mxu0 0
    %1953 = vmatmul.mubr.bf16.gmra.mxu0 %v916
    %v1954 = vpop.f32.mrf.mxu0
    %v1955 = vadd.f32 %v302, %v1954
    %v1956 = vpop.f32.mrf.mxu0
    %v1957 = vpop.f32.mrf.mxu0
    %v1958 = vadd.f32 %v302, %v1957
    %v1959 = vpop.f32.mrf.mxu0
    %1960 = vmatprep.mubr.bf16.mxu0 0
    %1961 = vmatmul.mubr.bf16.gmra.mxu0 %v917
    %v1962 = vpop.f32.mrf.mxu0
    %v1963 = vadd.f32 %v302, %v1962
    %v1964 = vpop.f32.mrf.mxu0
    %v1965 = vpop.f32.mrf.mxu0
    %v1966 = vadd.f32 %v302, %v1965
    %v1967 = vpop.f32.mrf.mxu0
    %1968 = vmatprep.mubr.bf16.mxu0 0
    %1969 = vmatmul.mubr.bf16.gmra.mxu0 %v918
    %v1970 = vpop.f32.mrf.mxu0
    %v1971 = vadd.f32 %v302, %v1970
    %v1972 = vpop.f32.mrf.mxu0
    %v1973 = vpop.f32.mrf.mxu0
    %v1974 = vadd.f32 %v302, %v1973
    %v1975 = vpop.f32.mrf.mxu0
    %1976 = vmatprep.mubr.bf16.mxu0 0
    %1977 = vmatmul.mubr.bf16.gmra.mxu0 %v919
    %v1978 = vpop.f32.mrf.mxu0
    %v1979 = vadd.f32 %v302, %v1978
    %v1980 = vpop.f32.mrf.mxu0
    %v1981 = vpop.f32.mrf.mxu0
    %v1982 = vadd.f32 %v302, %v1981
    %v1983 = vpop.f32.mrf.mxu0
    %1984 = vmatprep.mubr.bf16.mxu0 0
    %1985 = vmatmul.mubr.bf16.gmra.mxu0 %v920
    %v1986 = vpop.f32.mrf.mxu0
    %v1987 = vadd.f32 %v302, %v1986
    %v1988 = vpop.f32.mrf.mxu0
    %v1989 = vpop.f32.mrf.mxu0
    %v1990 = vadd.f32 %v302, %v1989
    %v1991 = vpop.f32.mrf.mxu0
    %1992 = vmatprep.mubr.bf16.mxu0 0
    %1993 = vmatmul.mubr.bf16.gmra.mxu0 %v921
    %v1994 = vpop.f32.mrf.mxu0
    %v1995 = vadd.f32 %v302, %v1994
    %v1996 = vpop.f32.mrf.mxu0
    %v1997 = vpop.f32.mrf.mxu0
    %v1998 = vadd.f32 %v302, %v1997
    %v1999 = vpop.f32.mrf.mxu0
    %2000 = vmatprep.mubr.bf16.mxu0 0
    %2001 = vmatmul.mubr.bf16.gmra.mxu0 %v922
    %v2002 = vpop.f32.mrf.mxu0
    %v2003 = vadd.f32 %v302, %v2002
    %v2004 = vpop.f32.mrf.mxu0
    %v2005 = vpop.f32.mrf.mxu0
    %v2006 = vadd.f32 %v302, %v2005
    %v2007 = vpop.f32.mrf.mxu0
    %2008 = vmatprep.mubr.bf16.mxu0 0
    %2009 = vmatmul.mubr.bf16.gmra.mxu0 %v923
    %v2010 = vpop.f32.mrf.mxu0
    %v2011 = vadd.f32 %v302, %v2010
    %v2012 = vpop.f32.mrf.mxu0
    %v2013 = vpop.f32.mrf.mxu0
    %v2014 = vadd.f32 %v302, %v2013
    %v2015 = vpop.f32.mrf.mxu0
    %2016 = vmatprep.mubr.bf16.mxu0 0
    %2017 = vmatmul.mubr.bf16.gmra.mxu0 %v924
    %v2018 = vpop.f32.mrf.mxu0
    %v2019 = vadd.f32 %v302, %v2018
    %v2020 = vpop.f32.mrf.mxu0
    %v2021 = vpop.f32.mrf.mxu0
    %v2022 = vadd.f32 %v302, %v2021
    %v2023 = vpop.f32.mrf.mxu0
    %2024 = vmatprep.mubr.bf16.mxu0 0
    %2025 = vmatmul.mubr.bf16.gmra.mxu0 %v925
    %v2026 = vpop.f32.mrf.mxu0
    %v2027 = vadd.f32 %v302, %v2026
    %v2028 = vpop.f32.mrf.mxu0
    %v2029 = vpop.f32.mrf.mxu0
    %v2030 = vadd.f32 %v302, %v2029
    %v2031 = vpop.f32.mrf.mxu0
    %2032 = vmatprep.mubr.bf16.mxu0 0
    %2033 = vmatmul.mubr.bf16.gmra.mxu0 %v926
    %v2034 = vpop.f32.mrf.mxu0
    %v2035 = vadd.f32 %v302, %v2034
    %v2036 = vpop.f32.mrf.mxu0
    %v2037 = vpop.f32.mrf.mxu0
    %v2038 = vadd.f32 %v302, %v2037
    %v2039 = vpop.f32.mrf.mxu0
    %2040 = vmatprep.mubr.bf16.mxu0 0
    %2041 = vmatmul.mubr.bf16.gmra.mxu0 %v927
    %v2042 = vpop.f32.mrf.mxu0
    %v2043 = vadd.f32 %v302, %v2042
    %v2044 = vpop.f32.mrf.mxu0
    %v2045 = vpop.f32.mrf.mxu0
    %v2046 = vadd.f32 %v302, %v2045
    %v2047 = vpop.f32.mrf.mxu0
    %2048 = vmatprep.mubr.bf16.mxu0 0
    %2049 = vmatmul.mubr.bf16.gmra.mxu0 %v928
    %v2050 = vpop.f32.mrf.mxu0
    %v2051 = vadd.f32 %v302, %v2050
    %v2052 = vpop.f32.mrf.mxu0
    %v2053 = vpop.f32.mrf.mxu0
    %v2054 = vadd.f32 %v302, %v2053
    %v2055 = vpop.f32.mrf.mxu0
    %2056 = vmatprep.mubr.bf16.mxu0 0
    %2057 = vmatmul.mubr.bf16.gmra.mxu0 %v929
    %v2058 = vpop.f32.mrf.mxu0
    %v2059 = vadd.f32 %v302, %v2058
    %v2060 = vpop.f32.mrf.mxu0
    %v2061 = vpop.f32.mrf.mxu0
    %v2062 = vadd.f32 %v302, %v2061
    %v2063 = vpop.f32.mrf.mxu0
    %2064 = vmatprep.mubr.bf16.mxu0 0
    %2065 = vmatmul.mubr.bf16.gmra.mxu0 %v930
    %v2066 = vpop.f32.mrf.mxu0
    %v2067 = vadd.f32 %v302, %v2066
    %v2068 = vpop.f32.mrf.mxu0
    %v2069 = vpop.f32.mrf.mxu0
    %v2070 = vadd.f32 %v302, %v2069
    %v2071 = vpop.f32.mrf.mxu0
    %2072 = vmatprep.mubr.bf16.mxu0 0
    %2073 = vmatmul.mubr.bf16.gmra.mxu0 %v931
    %v2074 = vpop.f32.mrf.mxu0
    %v2075 = vadd.f32 %v302, %v2074
    %v2076 = vpop.f32.mrf.mxu0
    %v2077 = vpop.f32.mrf.mxu0
    %v2078 = vadd.f32 %v302, %v2077
    %v2079 = vpop.f32.mrf.mxu0
    %2080 = vmatprep.mubr.bf16.mxu0 0
    %2081 = vmatmul.mubr.bf16.gmra.mxu0 %v932
    %v2082 = vpop.f32.mrf.mxu0
    %v2083 = vadd.f32 %v302, %v2082
    %v2084 = vpop.f32.mrf.mxu0
    %v2085 = vpop.f32.mrf.mxu0
    %v2086 = vadd.f32 %v302, %v2085
    %v2087 = vpop.f32.mrf.mxu0
    %2088 = vmatprep.mubr.bf16.mxu0 0
    %2089 = vmatmul.mubr.bf16.gmra.mxu0 %v933
    %v2090 = vpop.f32.mrf.mxu0
    %v2091 = vadd.f32 %v302, %v2090
    %v2092 = vpop.f32.mrf.mxu0
    %v2093 = vpop.f32.mrf.mxu0
    %v2094 = vadd.f32 %v302, %v2093
    %v2095 = vpop.f32.mrf.mxu0
    %2096 = vmatprep.mubr.bf16.mxu0 0
    %2097 = vmatmul.mubr.bf16.gmra.mxu0 %v934
    %v2098 = vpop.f32.mrf.mxu0
    %v2099 = vadd.f32 %v302, %v2098
    %v2100 = vpop.f32.mrf.mxu0
    %v2101 = vpop.f32.mrf.mxu0
    %v2102 = vadd.f32 %v302, %v2101
    %v2103 = vpop.f32.mrf.mxu0
    %2104 = vmatprep.mubr.bf16.mxu0 0
    %2105 = vmatmul.mubr.bf16.gmra.mxu0 %v935
    %v2106 = vpop.f32.mrf.mxu0
    %v2107 = vadd.f32 %v302, %v2106
    %v2108 = vpop.f32.mrf.mxu0
    %v2109 = vpop.f32.mrf.mxu0
    %v2110 = vadd.f32 %v302, %v2109
    %v2111 = vpop.f32.mrf.mxu0
    %2112 = vmatprep.mubr.bf16.mxu0 0
    %2113 = vmatmul.mubr.bf16.gmra.mxu0 %v936
    %v2114 = vpop.f32.mrf.mxu0
    %v2115 = vadd.f32 %v302, %v2114
    %v2116 = vpop.f32.mrf.mxu0
    %v2117 = vpop.f32.mrf.mxu0
    %v2118 = vadd.f32 %v302, %v2117
    %v2119 = vpop.f32.mrf.mxu0
    %2120 = vmatprep.mubr.bf16.mxu0 0
    %2121 = vmatmul.mubr.bf16.gmra.mxu0 %v937
    %v2122 = vpop.f32.mrf.mxu0
    %v2123 = vadd.f32 %v302, %v2122
    %v2124 = vpop.f32.mrf.mxu0
    %v2125 = vpop.f32.mrf.mxu0
    %v2126 = vadd.f32 %v302, %v2125
    %v2127 = vpop.f32.mrf.mxu0
    %2128 = vmatprep.mubr.bf16.mxu0 0
    %2129 = vmatmul.mubr.bf16.gmra.mxu0 %v938
    %v2130 = vpop.f32.mrf.mxu0
    %v2131 = vadd.f32 %v302, %v2130
    %v2132 = vpop.f32.mrf.mxu0
    %v2133 = vpop.f32.mrf.mxu0
    %v2134 = vadd.f32 %v302, %v2133
    %v2135 = vpop.f32.mrf.mxu0
    %2136 = vmatprep.mubr.bf16.mxu0 0
    %2137 = vmatmul.mubr.bf16.gmra.mxu0 %v939
    %v2138 = vpop.f32.mrf.mxu0
    %v2139 = vadd.f32 %v302, %v2138
    %v2140 = vpop.f32.mrf.mxu0
    %v2141 = vpop.f32.mrf.mxu0
    %v2142 = vadd.f32 %v302, %v2141
    %v2143 = vpop.f32.mrf.mxu0
    %2144 = vmatprep.mubr.bf16.mxu0 0
    %2145 = vmatmul.mubr.bf16.gmra.mxu0 %v940
    %v2146 = vpop.f32.mrf.mxu0
    %v2147 = vadd.f32 %v302, %v2146
    %v2148 = vpop.f32.mrf.mxu0
    %v2149 = vpop.f32.mrf.mxu0
    %v2150 = vadd.f32 %v302, %v2149
    %v2151 = vpop.f32.mrf.mxu0
    %2152 = vmatprep.mubr.bf16.mxu0 0
    %2153 = vmatmul.mubr.bf16.gmra.mxu0 %v941
    %v2154 = vpop.f32.mrf.mxu0
    %v2155 = vadd.f32 %v302, %v2154
    %v2156 = vpop.f32.mrf.mxu0
    %v2157 = vpop.f32.mrf.mxu0
    %v2158 = vadd.f32 %v302, %v2157
    %v2159 = vpop.f32.mrf.mxu0
    %2160 = vmatprep.mubr.bf16.mxu0 0
    %2161 = vmatmul.mubr.bf16.gmra.mxu0 %v942
    %v2162 = vpop.f32.mrf.mxu0
    %v2163 = vadd.f32 %v302, %v2162
    %v2164 = vpop.f32.mrf.mxu0
    %v2165 = vpop.f32.mrf.mxu0
    %v2166 = vadd.f32 %v302, %v2165
    %v2167 = vpop.f32.mrf.mxu0
    %2168 = vmatprep.mubr.bf16.mxu0 0
    %2169 = vmatmul.mubr.bf16.gmra.mxu0 %v943
    %v2170 = vpop.f32.mrf.mxu0
    %v2171 = vadd.f32 %v302, %v2170
    %v2172 = vpop.f32.mrf.mxu0
    %v2173 = vpop.f32.mrf.mxu0
    %v2174 = vadd.f32 %v302, %v2173
    %v2175 = vpop.f32.mrf.mxu0
    %2176 = vdwg.mxu0
    %v2177 = vmax.f32 %v1155, 0.0
    %v2178 = vmax.f32 %v1158, 0.0
    %v2179 = vmax.f32 %v1163, 0.0
    %v2180 = vmax.f32 %v1166, 0.0
    %v2181 = vmax.f32 %v1171, 0.0
    %v2182 = vmax.f32 %v1174, 0.0
    %v2183 = vmax.f32 %v1179, 0.0
    %v2184 = vmax.f32 %v1182, 0.0
    %v2185 = vmax.f32 %v1187, 0.0
    %v2186 = vmax.f32 %v1190, 0.0
    %v2187 = vmax.f32 %v1195, 0.0
    %v2188 = vmax.f32 %v1198, 0.0
    %v2189 = vmax.f32 %v1203, 0.0
    %v2190 = vmax.f32 %v1206, 0.0
    %v2191 = vmax.f32 %v1211, 0.0
    %v2192 = vmax.f32 %v1214, 0.0
    %v2193 = vmax.f32 %v1219, 0.0
    %v2194 = vmax.f32 %v1222, 0.0
    %v2195 = vmax.f32 %v1227, 0.0
    %v2196 = vmax.f32 %v1230, 0.0
    %v2197 = vmax.f32 %v1235, 0.0
    %v2198 = vmax.f32 %v1238, 0.0
    %v2199 = vmax.f32 %v1243, 0.0
    %v2200 = vmax.f32 %v1246, 0.0
    %v2201 = vmax.f32 %v1251, 0.0
    %v2202 = vmax.f32 %v1254, 0.0
    %v2203 = vmax.f32 %v1259, 0.0
    %v2204 = vmax.f32 %v1262, 0.0
    %v2205 = vmax.f32 %v1267, 0.0
    %v2206 = vmax.f32 %v1270, 0.0
    %v2207 = vmax.f32 %v1275, 0.0
    %v2208 = vmax.f32 %v1278, 0.0
    %v2209 = vmax.f32 %v1283, 0.0
    %v2210 = vmax.f32 %v1286, 0.0
    %v2211 = vmax.f32 %v1291, 0.0
    %v2212 = vmax.f32 %v1294, 0.0
    %v2213 = vmax.f32 %v1299, 0.0
    %v2214 = vmax.f32 %v1302, 0.0
    %v2215 = vmax.f32 %v1307, 0.0
    %v2216 = vmax.f32 %v1310, 0.0
    %v2217 = vmax.f32 %v1315, 0.0
    %v2218 = vmax.f32 %v1318, 0.0
    %v2219 = vmax.f32 %v1323, 0.0
    %v2220 = vmax.f32 %v1326, 0.0
    %v2221 = vmax.f32 %v1331, 0.0
    %v2222 = vmax.f32 %v1334, 0.0
    %v2223 = vmax.f32 %v1339, 0.0
    %v2224 = vmax.f32 %v1342, 0.0
    %v2225 = vmax.f32 %v1347, 0.0
    %v2226 = vmax.f32 %v1350, 0.0
    %v2227 = vmax.f32 %v1355, 0.0
    %v2228 = vmax.f32 %v1358, 0.0
    %v2229 = vmax.f32 %v1363, 0.0
    %v2230 = vmax.f32 %v1366, 0.0
    %v2231 = vmax.f32 %v1371, 0.0
    %v2232 = vmax.f32 %v1374, 0.0
    %v2233 = vmax.f32 %v1379, 0.0
    %v2234 = vmax.f32 %v1382, 0.0
    %v2235 = vmax.f32 %v1387, 0.0
    %v2236 = vmax.f32 %v1390, 0.0
    %v2237 = vmax.f32 %v1395, 0.0
    %v2238 = vmax.f32 %v1398, 0.0
    %v2239 = vmax.f32 %v1403, 0.0
    %v2240 = vmax.f32 %v1406, 0.0
    %v2241 = vmax.f32 %v1411, 0.0
    %v2242 = vmax.f32 %v1414, 0.0
    %v2243 = vmax.f32 %v1419, 0.0
    %v2244 = vmax.f32 %v1422, 0.0
    %v2245 = vmax.f32 %v1427, 0.0
    %v2246 = vmax.f32 %v1430, 0.0
    %v2247 = vmax.f32 %v1435, 0.0
    %v2248 = vmax.f32 %v1438, 0.0
    %v2249 = vmax.f32 %v1443, 0.0
    %v2250 = vmax.f32 %v1446, 0.0
    %v2251 = vmax.f32 %v1451, 0.0
    %v2252 = vmax.f32 %v1454, 0.0
    %v2253 = vmax.f32 %v1459, 0.0
    %v2254 = vmax.f32 %v1462, 0.0
    %v2255 = vmax.f32 %v1467, 0.0
    %v2256 = vmax.f32 %v1470, 0.0
    %v2257 = vmax.f32 %v1475, 0.0
    %v2258 = vmax.f32 %v1478, 0.0
    %v2259 = vmax.f32 %v1483, 0.0
    %v2260 = vmax.f32 %v1486, 0.0
    %v2261 = vmax.f32 %v1491, 0.0
    %v2262 = vmax.f32 %v1494, 0.0
    %v2263 = vmax.f32 %v1499, 0.0
    %v2264 = vmax.f32 %v1502, 0.0
    %v2265 = vmax.f32 %v1507, 0.0
    %v2266 = vmax.f32 %v1510, 0.0
    %v2267 = vmax.f32 %v1515, 0.0
    %v2268 = vmax.f32 %v1518, 0.0
    %v2269 = vmax.f32 %v1523, 0.0
    %v2270 = vmax.f32 %v1526, 0.0
    %v2271 = vmax.f32 %v1531, 0.0
    %v2272 = vmax.f32 %v1534, 0.0
    %v2273 = vmax.f32 %v1539, 0.0
    %v2274 = vmax.f32 %v1542, 0.0
    %v2275 = vmax.f32 %v1547, 0.0
    %v2276 = vmax.f32 %v1550, 0.0
    %v2277 = vmax.f32 %v1555, 0.0
    %v2278 = vmax.f32 %v1558, 0.0
    %v2279 = vmax.f32 %v1563, 0.0
    %v2280 = vmax.f32 %v1566, 0.0
    %v2281 = vmax.f32 %v1571, 0.0
    %v2282 = vmax.f32 %v1574, 0.0
    %v2283 = vmax.f32 %v1579, 0.0
    %v2284 = vmax.f32 %v1582, 0.0
    %v2285 = vmax.f32 %v1587, 0.0
    %v2286 = vmax.f32 %v1590, 0.0
    %v2287 = vmax.f32 %v1595, 0.0
    %v2288 = vmax.f32 %v1598, 0.0
    %v2289 = vmax.f32 %v1603, 0.0
    %v2290 = vmax.f32 %v1606, 0.0
    %v2291 = vmax.f32 %v1611, 0.0
    %v2292 = vmax.f32 %v1614, 0.0
    %v2293 = vmax.f32 %v1619, 0.0
    %v2294 = vmax.f32 %v1622, 0.0
    %v2295 = vmax.f32 %v1627, 0.0
    %v2296 = vmax.f32 %v1630, 0.0
    %v2297 = vmax.f32 %v1635, 0.0
    %v2298 = vmax.f32 %v1638, 0.0
    %v2299 = vmax.f32 %v1643, 0.0
    %v2300 = vmax.f32 %v1646, 0.0
    %v2301 = vmax.f32 %v1651, 0.0
    %v2302 = vmax.f32 %v1654, 0.0
    %v2303 = vmax.f32 %v1659, 0.0
    %v2304 = vmax.f32 %v1662, 0.0
    %v2305 = vmax.f32 %v1667, 0.0
    %v2306 = vmax.f32 %v1670, 0.0
    %v2307 = vmax.f32 %v1675, 0.0
    %v2308 = vmax.f32 %v1678, 0.0
    %v2309 = vmax.f32 %v1683, 0.0
    %v2310 = vmax.f32 %v1686, 0.0
    %v2311 = vmax.f32 %v1691, 0.0
    %v2312 = vmax.f32 %v1694, 0.0
    %v2313 = vmax.f32 %v1699, 0.0
    %v2314 = vmax.f32 %v1702, 0.0
    %v2315 = vmax.f32 %v1707, 0.0
    %v2316 = vmax.f32 %v1710, 0.0
    %v2317 = vmax.f32 %v1715, 0.0
    %v2318 = vmax.f32 %v1718, 0.0
    %v2319 = vmax.f32 %v1723, 0.0
    %v2320 = vmax.f32 %v1726, 0.0
    %v2321 = vmax.f32 %v1731, 0.0
    %v2322 = vmax.f32 %v1734, 0.0
    %v2323 = vmax.f32 %v1739, 0.0
    %v2324 = vmax.f32 %v1742, 0.0
    %v2325 = vmax.f32 %v1747, 0.0
    %v2326 = vmax.f32 %v1750, 0.0
    %v2327 = vmax.f32 %v1755, 0.0
    %v2328 = vmax.f32 %v1758, 0.0
    %v2329 = vmax.f32 %v1763, 0.0
    %v2330 = vmax.f32 %v1766, 0.0
    %v2331 = vmax.f32 %v1771, 0.0
    %v2332 = vmax.f32 %v1774, 0.0
    %v2333 = vmax.f32 %v1779, 0.0
    %v2334 = vmax.f32 %v1782, 0.0
    %v2335 = vmax.f32 %v1787, 0.0
    %v2336 = vmax.f32 %v1790, 0.0
    %v2337 = vmax.f32 %v1795, 0.0
    %v2338 = vmax.f32 %v1798, 0.0
    %v2339 = vmax.f32 %v1803, 0.0
    %v2340 = vmax.f32 %v1806, 0.0
    %v2341 = vmax.f32 %v1811, 0.0
    %v2342 = vmax.f32 %v1814, 0.0
    %v2343 = vmax.f32 %v1819, 0.0
    %v2344 = vmax.f32 %v1822, 0.0
    %v2345 = vmax.f32 %v1827, 0.0
    %v2346 = vmax.f32 %v1830, 0.0
    %v2347 = vmax.f32 %v1835, 0.0
    %v2348 = vmax.f32 %v1838, 0.0
    %v2349 = vmax.f32 %v1843, 0.0
    %v2350 = vmax.f32 %v1846, 0.0
    %v2351 = vmax.f32 %v1851, 0.0
    %v2352 = vmax.f32 %v1854, 0.0
    %v2353 = vmax.f32 %v1859, 0.0
    %v2354 = vmax.f32 %v1862, 0.0
    %v2355 = vmax.f32 %v1867, 0.0
    %v2356 = vmax.f32 %v1870, 0.0
    %v2357 = vmax.f32 %v1875, 0.0
    %v2358 = vmax.f32 %v1878, 0.0
    %v2359 = vmax.f32 %v1883, 0.0
    %v2360 = vmax.f32 %v1886, 0.0
    %v2361 = vmax.f32 %v1891, 0.0
    %v2362 = vmax.f32 %v1894, 0.0
    %v2363 = vmax.f32 %v1899, 0.0
    %v2364 = vmax.f32 %v1902, 0.0
    %v2365 = vmax.f32 %v1907, 0.0
    %v2366 = vmax.f32 %v1910, 0.0
    %v2367 = vmax.f32 %v1915, 0.0
    %v2368 = vmax.f32 %v1918, 0.0
    %v2369 = vmax.f32 %v1923, 0.0
    %v2370 = vmax.f32 %v1926, 0.0
    %v2371 = vmax.f32 %v1931, 0.0
    %v2372 = vmax.f32 %v1934, 0.0
    %v2373 = vmax.f32 %v1939, 0.0
    %v2374 = vmax.f32 %v1942, 0.0
    %v2375 = vmax.f32 %v1947, 0.0
    %v2376 = vmax.f32 %v1950, 0.0
    %v2377 = vmax.f32 %v1955, 0.0
    %v2378 = vmax.f32 %v1958, 0.0
    %v2379 = vmax.f32 %v1963, 0.0
    %v2380 = vmax.f32 %v1966, 0.0
    %v2381 = vmax.f32 %v1971, 0.0
    %v2382 = vmax.f32 %v1974, 0.0
    %v2383 = vmax.f32 %v1979, 0.0
    %v2384 = vmax.f32 %v1982, 0.0
    %v2385 = vmax.f32 %v1987, 0.0
    %v2386 = vmax.f32 %v1990, 0.0
    %v2387 = vmax.f32 %v1995, 0.0
    %v2388 = vmax.f32 %v1998, 0.0
    %v2389 = vmax.f32 %v2003, 0.0
    %v2390 = vmax.f32 %v2006, 0.0
    %v2391 = vmax.f32 %v2011, 0.0
    %v2392 = vmax.f32 %v2014, 0.0
    %v2393 = vmax.f32 %v2019, 0.0
    %v2394 = vmax.f32 %v2022, 0.0
    %v2395 = vmax.f32 %v2027, 0.0
    %v2396 = vmax.f32 %v2030, 0.0
    %v2397 = vmax.f32 %v2035, 0.0
    %v2398 = vmax.f32 %v2038, 0.0
    %v2399 = vmax.f32 %v2043, 0.0
    %v2400 = vmax.f32 %v2046, 0.0
    %v2401 = vmax.f32 %v2051, 0.0
    %v2402 = vmax.f32 %v2054, 0.0
    %v2403 = vmax.f32 %v2059, 0.0
    %v2404 = vmax.f32 %v2062, 0.0
    %v2405 = vmax.f32 %v2067, 0.0
    %v2406 = vmax.f32 %v2070, 0.0
    %v2407 = vmax.f32 %v2075, 0.0
    %v2408 = vmax.f32 %v2078, 0.0
    %v2409 = vmax.f32 %v2083, 0.0
    %v2410 = vmax.f32 %v2086, 0.0
    %v2411 = vmax.f32 %v2091, 0.0
    %v2412 = vmax.f32 %v2094, 0.0
    %v2413 = vmax.f32 %v2099, 0.0
    %v2414 = vmax.f32 %v2102, 0.0
    %v2415 = vmax.f32 %v2107, 0.0
    %v2416 = vmax.f32 %v2110, 0.0
    %v2417 = vmax.f32 %v2115, 0.0
    %v2418 = vmax.f32 %v2118, 0.0
    %v2419 = vmax.f32 %v2123, 0.0
    %v2420 = vmax.f32 %v2126, 0.0
    %v2421 = vmax.f32 %v2131, 0.0
    %v2422 = vmax.f32 %v2134, 0.0
    %v2423 = vmax.f32 %v2139, 0.0
    %v2424 = vmax.f32 %v2142, 0.0
    %v2425 = vmax.f32 %v2147, 0.0
    %v2426 = vmax.f32 %v2150, 0.0
    %v2427 = vmax.f32 %v2155, 0.0
    %v2428 = vmax.f32 %v2158, 0.0
    %v2429 = vmax.f32 %v2163, 0.0
    %v2430 = vmax.f32 %v2166, 0.0
    %v2431 = vmax.f32 %v2171, 0.0
    %v2432 = vmax.f32 %v2174, 0.0
    %v2433 = vld [vmem:[%s3] sm:$0xff]
    %v2434 = vld [vmem:[%s3 + $0x8] sm:$0xff]
    %v2435 = vld [vmem:[%s3 + $0x10] sm:$0xff]
    %v2436 = vld [vmem:[%s3 + $0x18] sm:$0xff]
    %v2441 = vcombine.high %v2433, %v2433
    %v2443 = vunpack.c.l.s4 1983009808
    %v2444 = vunpack.c.0.s8 %v2443
    %v2445 = vlaneseq
    %v2446 = vshrl.u32 %v2445, 7
    %v2447 = vsub.s32 %v2444, %v2446
    %v2448 = vrot.slane %v2433, %v2447
    %v2450 = vunpack.c.l.s4 1983009808
    %v2451 = vunpack.c.0.s8 %v2450
    %v2452 = vlaneseq
    %v2453 = vshrl.u32 %v2452, 7
    %v2454 = vsub.s32 %v2451, %v2453
    %v2455 = vrot.slane %v2441, %v2454
    %v2456 = vcombine.high %v2448, %v2448
    %v2457 = vcombine.high %v2455, %v2455
    %v2458 = vcombine.high %v2434, %v2434
    %v2460 = vunpack.c.l.s4 1983009808
    %v2461 = vunpack.c.0.s8 %v2460
    %v2462 = vlaneseq
    %v2463 = vshrl.u32 %v2462, 7
    %v2464 = vsub.s32 %v2461, %v2463
    %v2465 = vrot.slane %v2434, %v2464
    %v2467 = vunpack.c.l.s4 1983009808
    %v2468 = vunpack.c.0.s8 %v2467
    %v2469 = vlaneseq
    %v2470 = vshrl.u32 %v2469, 7
    %v2471 = vsub.s32 %v2468, %v2470
    %v2472 = vrot.slane %v2458, %v2471
    %v2473 = vcombine.high %v2465, %v2465
    %v2474 = vcombine.high %v2472, %v2472
    %v2475 = vcombine.high %v2435, %v2435
    %v2477 = vunpack.c.l.s4 1983009808
    %v2478 = vunpack.c.0.s8 %v2477
    %v2479 = vlaneseq
    %v2480 = vshrl.u32 %v2479, 7
    %v2481 = vsub.s32 %v2478, %v2480
    %v2482 = vrot.slane %v2435, %v2481
    %v2484 = vunpack.c.l.s4 1983009808
    %v2485 = vunpack.c.0.s8 %v2484
    %v2486 = vlaneseq
    %v2487 = vshrl.u32 %v2486, 7
    %v2488 = vsub.s32 %v2485, %v2487
    %v2489 = vrot.slane %v2475, %v2488
    %v2490 = vcombine.high %v2482, %v2482
    %v2491 = vcombine.high %v2489, %v2489
    %v2492 = vcombine.high %v2436, %v2436
    %v2494 = vunpack.c.l.s4 1983009808
    %v2495 = vunpack.c.0.s8 %v2494
    %v2496 = vlaneseq
    %v2497 = vshrl.u32 %v2496, 7
    %v2498 = vsub.s32 %v2495, %v2497
    %v2499 = vrot.slane %v2436, %v2498
    %v2501 = vunpack.c.l.s4 1983009808
    %v2502 = vunpack.c.0.s8 %v2501
    %v2503 = vlaneseq
    %v2504 = vshrl.u32 %v2503, 7
    %v2505 = vsub.s32 %v2502, %v2504
    %v2506 = vrot.slane %v2492, %v2505
    %v2507 = vcombine.high %v2499, %v2499
    %v2508 = vcombine.high %v2506, %v2506
    %2525 = vmatprep.subr.mxu0 0.0
    %2526 = vmatpush1.msra.mxu0 %v2192
    %2527 = vmatprep.subr.mxu0 0.0
    %2528 = vmatpush1.msra.mxu0 %v2191
    %2529 = vmatprep.subr.mxu0 0.0
    %2530 = vmatpush1.msra.mxu0 %v2190
    %2531 = vmatprep.subr.mxu0 0.0
    %2532 = vmatpush1.msra.mxu0 %v2189
    %2533 = vmatprep.subr.mxu0 0.0
    %2534 = vmatpush1.msra.mxu0 %v2188
    %2535 = vmatprep.subr.mxu0 0.0
    %2536 = vmatpush1.msra.mxu0 %v2187
    %2537 = vmatprep.subr.mxu0 0.0
    %2538 = vmatpush1.msra.mxu0 %v2186
    %2539 = vmatprep.subr.mxu0 0.0
    %2540 = vmatpush1.msra.mxu0 %v2185
    %2541 = vmatprep.subr.mxu0 0.0
    %2542 = vmatpush1.msra.mxu0 %v2184
    %2543 = vmatprep.subr.mxu0 0.0
    %2544 = vmatpush1.msra.mxu0 %v2183
    %2545 = vmatprep.subr.mxu0 0.0
    %2546 = vmatpush1.msra.mxu0 %v2182
    %2547 = vmatprep.subr.mxu0 0.0
    %2548 = vmatpush1.msra.mxu0 %v2181
    %2549 = vmatprep.subr.mxu0 0.0
    %2550 = vmatpush1.msra.mxu0 %v2180
    %2551 = vmatprep.subr.mxu0 0.0
    %2552 = vmatpush1.msra.mxu0 %v2179
    %2553 = vmatprep.subr.mxu0 0.0
    %2554 = vmatpush1.msra.mxu0 %v2178
    %2555 = vmatprep.subr.mxu0 0.0
    %2556 = vmatpush1.msra.mxu0 %v2177
    %2557 = vmatprep.subr.mxu0 0.0
    %2558 = vmatpush2.msra.mxu0 %v2208
    %2559 = vmatprep.subr.mxu0 0.0
    %2560 = vmatpush2.msra.mxu0 %v2207
    %2561 = vmatprep.subr.mxu0 0.0
    %2562 = vmatpush2.msra.mxu0 %v2206
    %2563 = vmatprep.subr.mxu0 0.0
    %2564 = vmatpush2.msra.mxu0 %v2205
    %2565 = vmatprep.subr.mxu0 0.0
    %2566 = vmatpush2.msra.mxu0 %v2204
    %2567 = vmatprep.subr.mxu0 0.0
    %2568 = vmatpush2.msra.mxu0 %v2203
    %2569 = vmatprep.subr.mxu0 0.0
    %2570 = vmatpush2.msra.mxu0 %v2202
    %2571 = vmatprep.subr.mxu0 0.0
    %2572 = vmatpush2.msra.mxu0 %v2201
    %2573 = vmatprep.subr.mxu0 0.0
    %2574 = vmatpush2.msra.mxu0 %v2200
    %2575 = vmatprep.subr.mxu0 0.0
    %2576 = vmatpush2.msra.mxu0 %v2199
    %2577 = vmatprep.subr.mxu0 0.0
    %2578 = vmatpush2.msra.mxu0 %v2198
    %2579 = vmatprep.subr.mxu0 0.0
    %2580 = vmatpush2.msra.mxu0 %v2197
    %2581 = vmatprep.subr.mxu0 0.0
    %2582 = vmatpush2.msra.mxu0 %v2196
    %2583 = vmatprep.subr.mxu0 0.0
    %2584 = vmatpush2.msra.mxu0 %v2195
    %2585 = vmatprep.subr.mxu0 0.0
    %2586 = vmatpush2.msra.mxu0 %v2194
    %2587 = vmatprep.subr.mxu0 0.0
    %2588 = vmatpush2.msra.mxu0 %v2193
    %2589 = vmatprep.mubr.f32.mxu0 %v2456
    %2590 = vmatmul.mubr.f32.gmra.mxu0 %v2448
    %v2591 = vpop.f32.mrf.mxu0
    %v2592 = vadd.f32 0.0, %v2591
    %v2593 = vpop.f32.mrf.mxu0
    %2594 = vdwg.mxu0
    %2595 = vmatprep.subr.mxu0 0.0
    %2596 = vmatpush1.msra.mxu0 %v2224
    %2597 = vmatprep.subr.mxu0 0.0
    %2598 = vmatpush1.msra.mxu0 %v2223
    %2599 = vmatprep.subr.mxu0 0.0
    %2600 = vmatpush1.msra.mxu0 %v2222
    %2601 = vmatprep.subr.mxu0 0.0
    %2602 = vmatpush1.msra.mxu0 %v2221
    %2603 = vmatprep.subr.mxu0 0.0
    %2604 = vmatpush1.msra.mxu0 %v2220
    %2605 = vmatprep.subr.mxu0 0.0
    %2606 = vmatpush1.msra.mxu0 %v2219
    %2607 = vmatprep.subr.mxu0 0.0
    %2608 = vmatpush1.msra.mxu0 %v2218
    %2609 = vmatprep.subr.mxu0 0.0
    %2610 = vmatpush1.msra.mxu0 %v2217
    %2611 = vmatprep.subr.mxu0 0.0
    %2612 = vmatpush1.msra.mxu0 %v2216
    %2613 = vmatprep.subr.mxu0 0.0
    %2614 = vmatpush1.msra.mxu0 %v2215
    %2615 = vmatprep.subr.mxu0 0.0
    %2616 = vmatpush1.msra.mxu0 %v2214
    %2617 = vmatprep.subr.mxu0 0.0
    %2618 = vmatpush1.msra.mxu0 %v2213
    %2619 = vmatprep.subr.mxu0 0.0
    %2620 = vmatpush1.msra.mxu0 %v2212
    %2621 = vmatprep.subr.mxu0 0.0
    %2622 = vmatpush1.msra.mxu0 %v2211
    %2623 = vmatprep.subr.mxu0 0.0
    %2624 = vmatpush1.msra.mxu0 %v2210
    %2625 = vmatprep.subr.mxu0 0.0
    %2626 = vmatpush1.msra.mxu0 %v2209
    %2627 = vmatprep.subr.mxu0 0.0
    %2628 = vmatpush2.msra.mxu0 %v2240
    %2629 = vmatprep.subr.mxu0 0.0
    %2630 = vmatpush2.msra.mxu0 %v2239
    %2631 = vmatprep.subr.mxu0 0.0
    %2632 = vmatpush2.msra.mxu0 %v2238
    %2633 = vmatprep.subr.mxu0 0.0
    %2634 = vmatpush2.msra.mxu0 %v2237
    %2635 = vmatprep.subr.mxu0 0.0
    %2636 = vmatpush2.msra.mxu0 %v2236
    %2637 = vmatprep.subr.mxu0 0.0
    %2638 = vmatpush2.msra.mxu0 %v2235
    %2639 = vmatprep.subr.mxu0 0.0
    %2640 = vmatpush2.msra.mxu0 %v2234
    %2641 = vmatprep.subr.mxu0 0.0
    %2642 = vmatpush2.msra.mxu0 %v2233
    %2643 = vmatprep.subr.mxu0 0.0
    %2644 = vmatpush2.msra.mxu0 %v2232
    %2645 = vmatprep.subr.mxu0 0.0
    %2646 = vmatpush2.msra.mxu0 %v2231
    %2647 = vmatprep.subr.mxu0 0.0
    %2648 = vmatpush2.msra.mxu0 %v2230
    %2649 = vmatprep.subr.mxu0 0.0
    %2650 = vmatpush2.msra.mxu0 %v2229
    %2651 = vmatprep.subr.mxu0 0.0
    %2652 = vmatpush2.msra.mxu0 %v2228
    %2653 = vmatprep.subr.mxu0 0.0
    %2654 = vmatpush2.msra.mxu0 %v2227
    %2655 = vmatprep.subr.mxu0 0.0
    %2656 = vmatpush2.msra.mxu0 %v2226
    %2657 = vmatprep.subr.mxu0 0.0
    %2658 = vmatpush2.msra.mxu0 %v2225
    %2659 = vmatprep.mubr.f32.mxu0 %v2457
    %2660 = vmatmul.mubr.f32.gmra.mxu0 %v2455
    %v2661 = vpop.f32.mrf.mxu0
    %v2662 = vadd.f32 %v2592, %v2661
    %v2663 = vpop.f32.mrf.mxu0
    %2664 = vdwg.mxu0
    %2665 = vmatprep.subr.mxu0 0.0
    %2666 = vmatpush1.msra.mxu0 %v2256
    %2667 = vmatprep.subr.mxu0 0.0
    %2668 = vmatpush1.msra.mxu0 %v2255
    %2669 = vmatprep.subr.mxu0 0.0
    %2670 = vmatpush1.msra.mxu0 %v2254
    %2671 = vmatprep.subr.mxu0 0.0
    %2672 = vmatpush1.msra.mxu0 %v2253
    %2673 = vmatprep.subr.mxu0 0.0
    %2674 = vmatpush1.msra.mxu0 %v2252
    %2675 = vmatprep.subr.mxu0 0.0
    %2676 = vmatpush1.msra.mxu0 %v2251
    %2677 = vmatprep.subr.mxu0 0.0
    %2678 = vmatpush1.msra.mxu0 %v2250
    %2679 = vmatprep.subr.mxu0 0.0
    %2680 = vmatpush1.msra.mxu0 %v2249
    %2681 = vmatprep.subr.mxu0 0.0
    %2682 = vmatpush1.msra.mxu0 %v2248
    %2683 = vmatprep.subr.mxu0 0.0
    %2684 = vmatpush1.msra.mxu0 %v2247
    %2685 = vmatprep.subr.mxu0 0.0
    %2686 = vmatpush1.msra.mxu0 %v2246
    %2687 = vmatprep.subr.mxu0 0.0
    %2688 = vmatpush1.msra.mxu0 %v2245
    %2689 = vmatprep.subr.mxu0 0.0
    %2690 = vmatpush1.msra.mxu0 %v2244
    %2691 = vmatprep.subr.mxu0 0.0
    %2692 = vmatpush1.msra.mxu0 %v2243
    %2693 = vmatprep.subr.mxu0 0.0
    %2694 = vmatpush1.msra.mxu0 %v2242
    %2695 = vmatprep.subr.mxu0 0.0
    %2696 = vmatpush1.msra.mxu0 %v2241
    %2697 = vmatprep.subr.mxu0 0.0
    %2698 = vmatpush2.msra.mxu0 %v2272
    %2699 = vmatprep.subr.mxu0 0.0
    %2700 = vmatpush2.msra.mxu0 %v2271
    %2701 = vmatprep.subr.mxu0 0.0
    %2702 = vmatpush2.msra.mxu0 %v2270
    %2703 = vmatprep.subr.mxu0 0.0
    %2704 = vmatpush2.msra.mxu0 %v2269
    %2705 = vmatprep.subr.mxu0 0.0
    %2706 = vmatpush2.msra.mxu0 %v2268
    %2707 = vmatprep.subr.mxu0 0.0
    %2708 = vmatpush2.msra.mxu0 %v2267
    %2709 = vmatprep.subr.mxu0 0.0
    %2710 = vmatpush2.msra.mxu0 %v2266
    %2711 = vmatprep.subr.mxu0 0.0
    %2712 = vmatpush2.msra.mxu0 %v2265
    %2713 = vmatprep.subr.mxu0 0.0
    %2714 = vmatpush2.msra.mxu0 %v2264
    %2715 = vmatprep.subr.mxu0 0.0
    %2716 = vmatpush2.msra.mxu0 %v2263
    %2717 = vmatprep.subr.mxu0 0.0
    %2718 = vmatpush2.msra.mxu0 %v2262
    %2719 = vmatprep.subr.mxu0 0.0
    %2720 = vmatpush2.msra.mxu0 %v2261
    %2721 = vmatprep.subr.mxu0 0.0
    %2722 = vmatpush2.msra.mxu0 %v2260
    %2723 = vmatprep.subr.mxu0 0.0
    %2724 = vmatpush2.msra.mxu0 %v2259
    %2725 = vmatprep.subr.mxu0 0.0
    %2726 = vmatpush2.msra.mxu0 %v2258
    %2727 = vmatprep.subr.mxu0 0.0
    %2728 = vmatpush2.msra.mxu0 %v2257
    %2729 = vmatprep.mubr.f32.mxu0 %v2473
    %2730 = vmatmul.mubr.f32.gmra.mxu0 %v2465
    %v2731 = vpop.f32.mrf.mxu0
    %v2732 = vadd.f32 %v2662, %v2731
    %v2733 = vpop.f32.mrf.mxu0
    %2734 = vdwg.mxu0
    %2735 = vmatprep.subr.mxu0 0.0
    %2736 = vmatpush1.msra.mxu0 %v2288
    %2737 = vmatprep.subr.mxu0 0.0
    %2738 = vmatpush1.msra.mxu0 %v2287
    %2739 = vmatprep.subr.mxu0 0.0
    %2740 = vmatpush1.msra.mxu0 %v2286
    %2741 = vmatprep.subr.mxu0 0.0
    %2742 = vmatpush1.msra.mxu0 %v2285
    %2743 = vmatprep.subr.mxu0 0.0
    %2744 = vmatpush1.msra.mxu0 %v2284
    %2745 = vmatprep.subr.mxu0 0.0
    %2746 = vmatpush1.msra.mxu0 %v2283
    %2747 = vmatprep.subr.mxu0 0.0
    %2748 = vmatpush1.msra.mxu0 %v2282
    %2749 = vmatprep.subr.mxu0 0.0
    %2750 = vmatpush1.msra.mxu0 %v2281
    %2751 = vmatprep.subr.mxu0 0.0
    %2752 = vmatpush1.msra.mxu0 %v2280
    %2753 = vmatprep.subr.mxu0 0.0
    %2754 = vmatpush1.msra.mxu0 %v2279
    %2755 = vmatprep.subr.mxu0 0.0
    %2756 = vmatpush1.msra.mxu0 %v2278
    %2757 = vmatprep.subr.mxu0 0.0
    %2758 = vmatpush1.msra.mxu0 %v2277
    %2759 = vmatprep.subr.mxu0 0.0
    %2760 = vmatpush1.msra.mxu0 %v2276
    %2761 = vmatprep.subr.mxu0 0.0
    %2762 = vmatpush1.msra.mxu0 %v2275
    %2763 = vmatprep.subr.mxu0 0.0
    %2764 = vmatpush1.msra.mxu0 %v2274
    %2765 = vmatprep.subr.mxu0 0.0
    %2766 = vmatpush1.msra.mxu0 %v2273
    %2767 = vmatprep.subr.mxu0 0.0
    %2768 = vmatpush2.msra.mxu0 %v2304
    %2769 = vmatprep.subr.mxu0 0.0
    %2770 = vmatpush2.msra.mxu0 %v2303
    %2771 = vmatprep.subr.mxu0 0.0
    %2772 = vmatpush2.msra.mxu0 %v2302
    %2773 = vmatprep.subr.mxu0 0.0
    %2774 = vmatpush2.msra.mxu0 %v2301
    %2775 = vmatprep.subr.mxu0 0.0
    %2776 = vmatpush2.msra.mxu0 %v2300
    %2777 = vmatprep.subr.mxu0 0.0
    %2778 = vmatpush2.msra.mxu0 %v2299
    %2779 = vmatprep.subr.mxu0 0.0
    %2780 = vmatpush2.msra.mxu0 %v2298
    %2781 = vmatprep.subr.mxu0 0.0
    %2782 = vmatpush2.msra.mxu0 %v2297
    %2783 = vmatprep.subr.mxu0 0.0
    %2784 = vmatpush2.msra.mxu0 %v2296
    %2785 = vmatprep.subr.mxu0 0.0
    %2786 = vmatpush2.msra.mxu0 %v2295
    %2787 = vmatprep.subr.mxu0 0.0
    %2788 = vmatpush2.msra.mxu0 %v2294
    %2789 = vmatprep.subr.mxu0 0.0
    %2790 = vmatpush2.msra.mxu0 %v2293
    %2791 = vmatprep.subr.mxu0 0.0
    %2792 = vmatpush2.msra.mxu0 %v2292
    %2793 = vmatprep.subr.mxu0 0.0
    %2794 = vmatpush2.msra.mxu0 %v2291
    %2795 = vmatprep.subr.mxu0 0.0
    %2796 = vmatpush2.msra.mxu0 %v2290
    %2797 = vmatprep.subr.mxu0 0.0
    %2798 = vmatpush2.msra.mxu0 %v2289
    %2799 = vmatprep.mubr.f32.mxu0 %v2474
    %2800 = vmatmul.mubr.f32.gmra.mxu0 %v2472
    %v2801 = vpop.f32.mrf.mxu0
    %v2802 = vadd.f32 %v2732, %v2801
    %v2803 = vpop.f32.mrf.mxu0
    %2804 = vdwg.mxu0
    %2805 = vmatprep.subr.mxu0 0.0
    %2806 = vmatpush1.msra.mxu0 %v2320
    %2807 = vmatprep.subr.mxu0 0.0
    %2808 = vmatpush1.msra.mxu0 %v2319
    %2809 = vmatprep.subr.mxu0 0.0
    %2810 = vmatpush1.msra.mxu0 %v2318
    %2811 = vmatprep.subr.mxu0 0.0
    %2812 = vmatpush1.msra.mxu0 %v2317
    %2813 = vmatprep.subr.mxu0 0.0
    %2814 = vmatpush1.msra.mxu0 %v2316
    %2815 = vmatprep.subr.mxu0 0.0
    %2816 = vmatpush1.msra.mxu0 %v2315
    %2817 = vmatprep.subr.mxu0 0.0
    %2818 = vmatpush1.msra.mxu0 %v2314
    %2819 = vmatprep.subr.mxu0 0.0
    %2820 = vmatpush1.msra.mxu0 %v2313
    %2821 = vmatprep.subr.mxu0 0.0
    %2822 = vmatpush1.msra.mxu0 %v2312
    %2823 = vmatprep.subr.mxu0 0.0
    %2824 = vmatpush1.msra.mxu0 %v2311
    %2825 = vmatprep.subr.mxu0 0.0
    %2826 = vmatpush1.msra.mxu0 %v2310
    %2827 = vmatprep.subr.mxu0 0.0
    %2828 = vmatpush1.msra.mxu0 %v2309
    %2829 = vmatprep.subr.mxu0 0.0
    %2830 = vmatpush1.msra.mxu0 %v2308
    %2831 = vmatprep.subr.mxu0 0.0
    %2832 = vmatpush1.msra.mxu0 %v2307
    %2833 = vmatprep.subr.mxu0 0.0
    %2834 = vmatpush1.msra.mxu0 %v2306
    %2835 = vmatprep.subr.mxu0 0.0
    %2836 = vmatpush1.msra.mxu0 %v2305
    %2837 = vmatprep.subr.mxu0 0.0
    %2838 = vmatpush2.msra.mxu0 %v2336
    %2839 = vmatprep.subr.mxu0 0.0
    %2840 = vmatpush2.msra.mxu0 %v2335
    %2841 = vmatprep.subr.mxu0 0.0
    %2842 = vmatpush2.msra.mxu0 %v2334
    %2843 = vmatprep.subr.mxu0 0.0
    %2844 = vmatpush2.msra.mxu0 %v2333
    %2845 = vmatprep.subr.mxu0 0.0
    %2846 = vmatpush2.msra.mxu0 %v2332
    %2847 = vmatprep.subr.mxu0 0.0
    %2848 = vmatpush2.msra.mxu0 %v2331
    %2849 = vmatprep.subr.mxu0 0.0
    %2850 = vmatpush2.msra.mxu0 %v2330
    %2851 = vmatprep.subr.mxu0 0.0
    %2852 = vmatpush2.msra.mxu0 %v2329
    %2853 = vmatprep.subr.mxu0 0.0
    %2854 = vmatpush2.msra.mxu0 %v2328
    %2855 = vmatprep.subr.mxu0 0.0
    %2856 = vmatpush2.msra.mxu0 %v2327
    %2857 = vmatprep.subr.mxu0 0.0
    %2858 = vmatpush2.msra.mxu0 %v2326
    %2859 = vmatprep.subr.mxu0 0.0
    %2860 = vmatpush2.msra.mxu0 %v2325
    %2861 = vmatprep.subr.mxu0 0.0
    %2862 = vmatpush2.msra.mxu0 %v2324
    %2863 = vmatprep.subr.mxu0 0.0
    %2864 = vmatpush2.msra.mxu0 %v2323
    %2865 = vmatprep.subr.mxu0 0.0
    %2866 = vmatpush2.msra.mxu0 %v2322
    %2867 = vmatprep.subr.mxu0 0.0
    %2868 = vmatpush2.msra.mxu0 %v2321
    %2869 = vmatprep.mubr.f32.mxu0 %v2490
    %2870 = vmatmul.mubr.f32.gmra.mxu0 %v2482
    %v2871 = vpop.f32.mrf.mxu0
    %v2872 = vadd.f32 %v2802, %v2871
    %v2873 = vpop.f32.mrf.mxu0
    %2874 = vdwg.mxu0
    %2875 = vmatprep.subr.mxu0 0.0
    %2876 = vmatpush1.msra.mxu0 %v2352
    %2877 = vmatprep.subr.mxu0 0.0
    %2878 = vmatpush1.msra.mxu0 %v2351
    %2879 = vmatprep.subr.mxu0 0.0
    %2880 = vmatpush1.msra.mxu0 %v2350
    %2881 = vmatprep.subr.mxu0 0.0
    %2882 = vmatpush1.msra.mxu0 %v2349
    %2883 = vmatprep.subr.mxu0 0.0
    %2884 = vmatpush1.msra.mxu0 %v2348
    %2885 = vmatprep.subr.mxu0 0.0
    %2886 = vmatpush1.msra.mxu0 %v2347
    %2887 = vmatprep.subr.mxu0 0.0
    %2888 = vmatpush1.msra.mxu0 %v2346
    %2889 = vmatprep.subr.mxu0 0.0
    %2890 = vmatpush1.msra.mxu0 %v2345
    %2891 = vmatprep.subr.mxu0 0.0
    %2892 = vmatpush1.msra.mxu0 %v2344
    %2893 = vmatprep.subr.mxu0 0.0
    %2894 = vmatpush1.msra.mxu0 %v2343
    %2895 = vmatprep.subr.mxu0 0.0
    %2896 = vmatpush1.msra.mxu0 %v2342
    %2897 = vmatprep.subr.mxu0 0.0
    %2898 = vmatpush1.msra.mxu0 %v2341
    %2899 = vmatprep.subr.mxu0 0.0
    %2900 = vmatpush1.msra.mxu0 %v2340
    %2901 = vmatprep.subr.mxu0 0.0
    %2902 = vmatpush1.msra.mxu0 %v2339
    %2903 = vmatprep.subr.mxu0 0.0
    %2904 = vmatpush1.msra.mxu0 %v2338
    %2905 = vmatprep.subr.mxu0 0.0
    %2906 = vmatpush1.msra.mxu0 %v2337
    %2907 = vmatprep.subr.mxu0 0.0
    %2908 = vmatpush2.msra.mxu0 %v2368
    %2909 = vmatprep.subr.mxu0 0.0
    %2910 = vmatpush2.msra.mxu0 %v2367
    %2911 = vmatprep.subr.mxu0 0.0
    %2912 = vmatpush2.msra.mxu0 %v2366
    %2913 = vmatprep.subr.mxu0 0.0
    %2914 = vmatpush2.msra.mxu0 %v2365
    %2915 = vmatprep.subr.mxu0 0.0
    %2916 = vmatpush2.msra.mxu0 %v2364
    %2917 = vmatprep.subr.mxu0 0.0
    %2918 = vmatpush2.msra.mxu0 %v2363
    %2919 = vmatprep.subr.mxu0 0.0
    %2920 = vmatpush2.msra.mxu0 %v2362
    %2921 = vmatprep.subr.mxu0 0.0
    %2922 = vmatpush2.msra.mxu0 %v2361
    %2923 = vmatprep.subr.mxu0 0.0
    %2924 = vmatpush2.msra.mxu0 %v2360
    %2925 = vmatprep.subr.mxu0 0.0
    %2926 = vmatpush2.msra.mxu0 %v2359
    %2927 = vmatprep.subr.mxu0 0.0
    %2928 = vmatpush2.msra.mxu0 %v2358
    %2929 = vmatprep.subr.mxu0 0.0
    %2930 = vmatpush2.msra.mxu0 %v2357
    %2931 = vmatprep.subr.mxu0 0.0
    %2932 = vmatpush2.msra.mxu0 %v2356
    %2933 = vmatprep.subr.mxu0 0.0
    %2934 = vmatpush2.msra.mxu0 %v2355
    %2935 = vmatprep.subr.mxu0 0.0
    %2936 = vmatpush2.msra.mxu0 %v2354
    %2937 = vmatprep.subr.mxu0 0.0
    %2938 = vmatpush2.msra.mxu0 %v2353
    %2939 = vmatprep.mubr.f32.mxu0 %v2491
    %2940 = vmatmul.mubr.f32.gmra.mxu0 %v2489
    %v2941 = vpop.f32.mrf.mxu0
    %v2942 = vadd.f32 %v2872, %v2941
    %v2943 = vpop.f32.mrf.mxu0
    %2944 = vdwg.mxu0
    %2945 = vmatprep.subr.mxu0 0.0
    %2946 = vmatpush1.msra.mxu0 %v2384
    %2947 = vmatprep.subr.mxu0 0.0
    %2948 = vmatpush1.msra.mxu0 %v2383
    %2949 = vmatprep.subr.mxu0 0.0
    %2950 = vmatpush1.msra.mxu0 %v2382
    %2951 = vmatprep.subr.mxu0 0.0
    %2952 = vmatpush1.msra.mxu0 %v2381
    %2953 = vmatprep.subr.mxu0 0.0
    %2954 = vmatpush1.msra.mxu0 %v2380
    %2955 = vmatprep.subr.mxu0 0.0
    %2956 = vmatpush1.msra.mxu0 %v2379
    %2957 = vmatprep.subr.mxu0 0.0
    %2958 = vmatpush1.msra.mxu0 %v2378
    %2959 = vmatprep.subr.mxu0 0.0
    %2960 = vmatpush1.msra.mxu0 %v2377
    %2961 = vmatprep.subr.mxu0 0.0
    %2962 = vmatpush1.msra.mxu0 %v2376
    %2963 = vmatprep.subr.mxu0 0.0
    %2964 = vmatpush1.msra.mxu0 %v2375
    %2965 = vmatprep.subr.mxu0 0.0
    %2966 = vmatpush1.msra.mxu0 %v2374
    %2967 = vmatprep.subr.mxu0 0.0
    %2968 = vmatpush1.msra.mxu0 %v2373
    %2969 = vmatprep.subr.mxu0 0.0
    %2970 = vmatpush1.msra.mxu0 %v2372
    %2971 = vmatprep.subr.mxu0 0.0
    %2972 = vmatpush1.msra.mxu0 %v2371
    %2973 = vmatprep.subr.mxu0 0.0
    %2974 = vmatpush1.msra.mxu0 %v2370
    %2975 = vmatprep.subr.mxu0 0.0
    %2976 = vmatpush1.msra.mxu0 %v2369
    %2977 = vmatprep.subr.mxu0 0.0
    %2978 = vmatpush2.msra.mxu0 %v2400
    %2979 = vmatprep.subr.mxu0 0.0
    %2980 = vmatpush2.msra.mxu0 %v2399
    %2981 = vmatprep.subr.mxu0 0.0
    %2982 = vmatpush2.msra.mxu0 %v2398
    %2983 = vmatprep.subr.mxu0 0.0
    %2984 = vmatpush2.msra.mxu0 %v2397
    %2985 = vmatprep.subr.mxu0 0.0
    %2986 = vmatpush2.msra.mxu0 %v2396
    %2987 = vmatprep.subr.mxu0 0.0
    %2988 = vmatpush2.msra.mxu0 %v2395
    %2989 = vmatprep.subr.mxu0 0.0
    %2990 = vmatpush2.msra.mxu0 %v2394
    %2991 = vmatprep.subr.mxu0 0.0
    %2992 = vmatpush2.msra.mxu0 %v2393
    %2993 = vmatprep.subr.mxu0 0.0
    %2994 = vmatpush2.msra.mxu0 %v2392
    %2995 = vmatprep.subr.mxu0 0.0
    %2996 = vmatpush2.msra.mxu0 %v2391
    %2997 = vmatprep.subr.mxu0 0.0
    %2998 = vmatpush2.msra.mxu0 %v2390
    %2999 = vmatprep.subr.mxu0 0.0
    %3000 = vmatpush2.msra.mxu0 %v2389
    %3001 = vmatprep.subr.mxu0 0.0
    %3002 = vmatpush2.msra.mxu0 %v2388
    %3003 = vmatprep.subr.mxu0 0.0
    %3004 = vmatpush2.msra.mxu0 %v2387
    %3005 = vmatprep.subr.mxu0 0.0
    %3006 = vmatpush2.msra.mxu0 %v2386
    %3007 = vmatprep.subr.mxu0 0.0
    %3008 = vmatpush2.msra.mxu0 %v2385
    %3009 = vmatprep.mubr.f32.mxu0 %v2507
    %3010 = vmatmul.mubr.f32.gmra.mxu0 %v2499
    %v3011 = vpop.f32.mrf.mxu0
    %v3012 = vadd.f32 %v2942, %v3011
    %v3013 = vpop.f32.mrf.mxu0
    %3014 = vdwg.mxu0
    %3015 = vmatprep.subr.mxu0 0.0
    %3016 = vmatpush1.msra.mxu0 %v2416
    %3017 = vmatprep.subr.mxu0 0.0
    %3018 = vmatpush1.msra.mxu0 %v2415
    %3019 = vmatprep.subr.mxu0 0.0
    %3020 = vmatpush1.msra.mxu0 %v2414
    %3021 = vmatprep.subr.mxu0 0.0
    %3022 = vmatpush1.msra.mxu0 %v2413
    %3023 = vmatprep.subr.mxu0 0.0
    %3024 = vmatpush1.msra.mxu0 %v2412
    %3025 = vmatprep.subr.mxu0 0.0
    %3026 = vmatpush1.msra.mxu0 %v2411
    %3027 = vmatprep.subr.mxu0 0.0
    %3028 = vmatpush1.msra.mxu0 %v2410
    %3029 = vmatprep.subr.mxu0 0.0
    %3030 = vmatpush1.msra.mxu0 %v2409
    %3031 = vmatprep.subr.mxu0 0.0
    %3032 = vmatpush1.msra.mxu0 %v2408
    %3033 = vmatprep.subr.mxu0 0.0
    %3034 = vmatpush1.msra.mxu0 %v2407
    %3035 = vmatprep.subr.mxu0 0.0
    %3036 = vmatpush1.msra.mxu0 %v2406
    %3037 = vmatprep.subr.mxu0 0.0
    %3038 = vmatpush1.msra.mxu0 %v2405
    %3039 = vmatprep.subr.mxu0 0.0
    %3040 = vmatpush1.msra.mxu0 %v2404
    %3041 = vmatprep.subr.mxu0 0.0
    %3042 = vmatpush1.msra.mxu0 %v2403
    %3043 = vmatprep.subr.mxu0 0.0
    %3044 = vmatpush1.msra.mxu0 %v2402
    %3045 = vmatprep.subr.mxu0 0.0
    %3046 = vmatpush1.msra.mxu0 %v2401
    %3047 = vmatprep.subr.mxu0 0.0
    %3048 = vmatpush2.msra.mxu0 %v2432
    %3049 = vmatprep.subr.mxu0 0.0
    %3050 = vmatpush2.msra.mxu0 %v2431
    %3051 = vmatprep.subr.mxu0 0.0
    %3052 = vmatpush2.msra.mxu0 %v2430
    %3053 = vmatprep.subr.mxu0 0.0
    %3054 = vmatpush2.msra.mxu0 %v2429
    %3055 = vmatprep.subr.mxu0 0.0
    %3056 = vmatpush2.msra.mxu0 %v2428
    %3057 = vmatprep.subr.mxu0 0.0
    %3058 = vmatpush2.msra.mxu0 %v2427
    %3059 = vmatprep.subr.mxu0 0.0
    %3060 = vmatpush2.msra.mxu0 %v2426
    %3061 = vmatprep.subr.mxu0 0.0
    %3062 = vmatpush2.msra.mxu0 %v2425
    %3063 = vmatprep.subr.mxu0 0.0
    %3064 = vmatpush2.msra.mxu0 %v2424
    %3065 = vmatprep.subr.mxu0 0.0
    %3066 = vmatpush2.msra.mxu0 %v2423
    %3067 = vmatprep.subr.mxu0 0.0
    %3068 = vmatpush2.msra.mxu0 %v2422
    %3069 = vmatprep.subr.mxu0 0.0
    %3070 = vmatpush2.msra.mxu0 %v2421
    %3071 = vmatprep.subr.mxu0 0.0
    %3072 = vmatpush2.msra.mxu0 %v2420
    %3073 = vmatprep.subr.mxu0 0.0
    %3074 = vmatpush2.msra.mxu0 %v2419
    %3075 = vmatprep.subr.mxu0 0.0
    %3076 = vmatpush2.msra.mxu0 %v2418
    %3077 = vmatprep.subr.mxu0 0.0
    %3078 = vmatpush2.msra.mxu0 %v2417
    %3079 = vmatprep.mubr.f32.mxu0 %v2508
    %3080 = vmatmul.mubr.f32.gmra.mxu0 %v2506
    %v3081 = vpop.f32.mrf.mxu0
    %v3082 = vadd.f32 %v3012, %v3081
    %v3083 = vpop.f32.mrf.mxu0
    %3084 = vdwg.mxu0
    %v3085 = vld [vmem:[%s4] sm:$0xff]
    %v3086 = vld [vmem:[%s4 + $0x8] sm:$0xff]
    %v3087 = vld [vmem:[%s4 + $0x10] sm:$0xff]
    %v3088 = vld [vmem:[%s4 + $0x18] sm:$0xff]
    %v3089 = vld [vmem:[%s4 + $0x20] sm:$0xff]
    %v3090 = vld [vmem:[%s4 + $0x28] sm:$0xff]
    %v3091 = vld [vmem:[%s4 + $0x30] sm:$0xff]
    %v3092 = vld [vmem:[%s4 + $0x38] sm:$0xff]
    %v3093 = vld [vmem:[%s4 + $0x40] sm:$0xff]
    %v3094 = vld [vmem:[%s4 + $0x48] sm:$0xff]
    %v3095 = vld [vmem:[%s4 + $0x50] sm:$0xff]
    %v3096 = vld [vmem:[%s4 + $0x58] sm:$0xff]
    %v3097 = vld [vmem:[%s4 + $0x60] sm:$0xff]
    %v3098 = vld [vmem:[%s4 + $0x68] sm:$0xff]
    %v3099 = vld [vmem:[%s4 + $0x70] sm:$0xff]
    %v3100 = vld [vmem:[%s4 + $0x78] sm:$0xff]
    %v3101 = vld [vmem:[%s5] sm:$0x1]
    %v3103 = vlaneseq
    %v3104 = vshrl.u32 %v3103, 7
    %v3105 = vsub.s32 0, %v3104
    %v3106 = vrot.slane %v3101, %v3105
    %3108 = vmatprep.subr.mxu0 0.0
    %3109 = vmatpush1.msra.mxu0 %v3100
    %3110 = vmatprep.subr.mxu0 0.0
    %3111 = vmatpush1.msra.mxu0 %v3099
    %3112 = vmatprep.subr.mxu0 0.0
    %3113 = vmatpush1.msra.mxu0 %v3098
    %3114 = vmatprep.subr.mxu0 0.0
    %3115 = vmatpush1.msra.mxu0 %v3097
    %3116 = vmatprep.subr.mxu0 0.0
    %3117 = vmatpush1.msra.mxu0 %v3096
    %3118 = vmatprep.subr.mxu0 0.0
    %3119 = vmatpush1.msra.mxu0 %v3095
    %3120 = vmatprep.subr.mxu0 0.0
    %3121 = vmatpush1.msra.mxu0 %v3094
    %3122 = vmatprep.subr.mxu0 0.0
    %3123 = vmatpush1.msra.mxu0 %v3093
    %3124 = vmatprep.subr.mxu0 0.0
    %3125 = vmatpush1.msra.mxu0 %v3092
    %3126 = vmatprep.subr.mxu0 0.0
    %3127 = vmatpush1.msra.mxu0 %v3091
    %3128 = vmatprep.subr.mxu0 0.0
    %3129 = vmatpush1.msra.mxu0 %v3090
    %3130 = vmatprep.subr.mxu0 0.0
    %3131 = vmatpush1.msra.mxu0 %v3089
    %3132 = vmatprep.subr.mxu0 0.0
    %3133 = vmatpush1.msra.mxu0 %v3088
    %3134 = vmatprep.subr.mxu0 0.0
    %3135 = vmatpush1.msra.mxu0 %v3087
    %3136 = vmatprep.subr.mxu0 0.0
    %3137 = vmatpush1.msra.mxu0 %v3086
    %3138 = vmatprep.subr.mxu0 0.0
    %3139 = vmatpush1.msra.mxu0 %v3085
    %3140 = vmatprep.subr.mxu0 0.0
    %3141 = vmatpush2.msra.mxu0 0.0
    %3142 = vmatprep.subr.mxu0 0.0
    %3143 = vmatpush2.msra.mxu0 0.0
    %3144 = vmatprep.subr.mxu0 0.0
    %3145 = vmatpush2.msra.mxu0 0.0
    %3146 = vmatprep.subr.mxu0 0.0
    %3147 = vmatpush2.msra.mxu0 0.0
    %3148 = vmatprep.subr.mxu0 0.0
    %3149 = vmatpush2.msra.mxu0 0.0
    %3150 = vmatprep.subr.mxu0 0.0
    %3151 = vmatpush2.msra.mxu0 0.0
    %3152 = vmatprep.subr.mxu0 0.0
    %3153 = vmatpush2.msra.mxu0 0.0
    %3154 = vmatprep.subr.mxu0 0.0
    %3155 = vmatpush2.msra.mxu0 0.0
    %3156 = vmatprep.subr.mxu0 0.0
    %3157 = vmatpush2.msra.mxu0 0.0
    %3158 = vmatprep.subr.mxu0 0.0
    %3159 = vmatpush2.msra.mxu0 0.0
    %3160 = vmatprep.subr.mxu0 0.0
    %3161 = vmatpush2.msra.mxu0 0.0
    %3162 = vmatprep.subr.mxu0 0.0
    %3163 = vmatpush2.msra.mxu0 0.0
    %3164 = vmatprep.subr.mxu0 0.0
    %3165 = vmatpush2.msra.mxu0 0.0
    %3166 = vmatprep.subr.mxu0 0.0
    %3167 = vmatpush2.msra.mxu0 0.0
    %3168 = vmatprep.subr.mxu0 0.0
    %3169 = vmatpush2.msra.mxu0 0.0
    %3170 = vmatprep.subr.mxu0 0.0
    %3171 = vmatpush2.msra.mxu0 0.0
    %3172 = vmatprep.mubr.f32.mxu0 0.0
    %3173 = vmatmul.mubr.f32.gmra.mxu0 %v3082
    %v3174 = vpop.f32.mrf.mxu0
    %v3175 = vadd.f32 %v3106, %v3174
    %v3176 = vpop.f32.mrf.mxu0
    %3177 = vdwg.mxu0
    %3178 = vst [vmem:[#allocation2] sm:$0x3] %v3175
    // Predicated region
    $region26: #{tsn_forward.1} parent=1 // pred_check
      _
    $region27: #{tsn_forward.1} parent=1 // pred_check_branch
      %3180 = sbr.rel (0) target = $region29
    $region28: #{tsn_forward.1} parent=1 // pred_region
      %s3182 = ssub.s32 32, 32
      %3183 = vsyncadd [#allocation3], %s3182
      %s3185 = sshll.u32 [#allocation2], 4
      %s3186 = int_to_ptr.vmem [resolvable:$true] %s3185
      %3188 = dma.vmem_to_hbm [thread:$0]  %s3186, 32, %s6, [#allocation3]
    $region29: #{tsn_forward.1} parent=1 // pred_fallthru
      _
    // Predicated region
    $region30: #{tsn_forward.1} parent=1 // pred_check
      _
    $region31: #{tsn_forward.1} parent=1 // pred_check_branch
      %3190 = sbr.rel (0) target = $region33
    $region32: #{tsn_forward.1} parent=1 // pred_region
      %3191 = dma.done [#allocation3], 32
    $region33: #{tsn_forward.1} parent=1 // pred_fallthru
      _
    %3192 = vsyncpa [#allocation3], 1

</llo_original>
